<compile_context>
chip_gen: v6e
topology: v6e:2x2x1
jax: 0.10.0
libtpu: 0.0.40
codegen_flags: <defaults>
</compile_context>

<pallas_src>
import functools

import jax
import jax.numpy as jnp
import numpy as np
from jax.experimental import pallas as pl
from jax.experimental.pallas import tpu as pltpu

EPS = 1e-5
NEG_SLOPE = 0.01  # nn.LeakyReLU() default


# ----------------------------------------------------------------------------- kernel
def inn_kernel(x1_ref, x2_ref, wf_ref, gf_ref, bef_ref, wg_ref, gg_ref, beg_ref,
               y1_ref, y2_ref, *, num_block, reverse, use_mxu, fold, inv_m):
    """Invertible coupling blocks on lane-dense, sublane-folded (R, Mp) halves.

    R = cm*fold rows (channel-major groups of `fold` sub-rows per channel),
    Mp = M/fold pixels per row on the 128-lane axis.

    Weight layouts (prepared by the wrapper):
      use_mxu=True : w_ref is (num_block, cm_out, cm_in) for jnp.dot(W, X); fold==1.
      use_mxu=False: w_ref is (num_block, cm_in, R, 1); w_ref[k, d] is the
                     per-output-row coefficient column multiplying
                     roll(x, shift=d*fold, axis=0).
    gamma/beta refs are (num_block, R, 1) (per-channel values repeated over the
    fold sub-rows) so they broadcast over lanes (Mp).
    """
    x1 = x1_ref[...]          # (R, Mp) f32
    x2 = x2_ref[...]
    rows = x1.shape[0]
    n_ch = rows // fold

    def group_expand(s):
        # (R,1) per-row lane-sums -> (R,1) per-channel totals (each channel's total
        # repeated over its `fold` contiguous rows).  All ops are on <= (8,1) data.
        if fold == 1:
            return s
        parts = []
        for c in range(n_ch):
            g = jnp.sum(s[c * fold:(c + 1) * fold, :], axis=0, keepdims=True)  # (1,1)
            parts.append(jnp.broadcast_to(g, (fold, 1)))
        return jnp.concatenate(parts, axis=0)

    def linear(w_ref, k, x):
        if use_mxu:
            return jnp.dot(w_ref[k], x, preferred_element_type=jnp.float32)
        # VPU path: cm MACs per element on fully packed (R, Mp) tiles.  The static
        # sublane rotation (lowers to sublane slice+concat / XLU rotate) aligns
        # input channel (c_out - d) mod cm with output row c_out for every fold
        # sub-row, so one lane-broadcast multiply covers all output channels.
        cm_in = w_ref.shape[1]
        acc = w_ref[k, 0] * x                                  # (R,1)*(R,Mp)
        for d in range(1, cm_in):
            acc = acc + w_ref[k, d] * jnp.roll(x, shift=d * fold, axis=0)
        return acc

    def subnet(w_ref, g_ref, b_ref, k, x):
        # 1x1 conv (bias dropped: cancels exactly under batch-stat BN) + folded BN
        # (single-pass sum / sum-of-squares) + LeakyReLU.
        h = linear(w_ref, k, x)                                # (R, Mp)
        s1 = group_expand(jnp.sum(h, axis=-1, keepdims=True))  # (R, 1)
        s2 = group_expand(jnp.sum(h * h, axis=-1, keepdims=True))
        mean = s1 * inv_m
        var = s2 * inv_m - mean * mean                         # biased batch variance
        scale = g_ref[k] * jax.lax.rsqrt(var + EPS)            # rsqrt -> EUP slot
        shift = b_ref[k] - mean * scale
        hn = h * scale + shift                                 # 2 VPU ops / element
        return jnp.where(hn >= 0, hn, NEG_SLOPE * hn)

    order = range(num_block - 1, -1, -1) if reverse else range(num_block)
    for k in order:   # unrolled: num_block is small, keeps LLO scheduling visible
        if reverse:
            x2 = x2 - subnet(wg_ref, gg_ref, beg_ref, k, x1)
            x1 = x1 - subnet(wf_ref, gf_ref, bef_ref, k, x2)
        else:
            x1 = x1 + subnet(wf_ref, gf_ref, bef_ref, k, x2)
            x2 = x2 + subnet(wg_ref, gg_ref, beg_ref, k, x1)

    y1_ref[...] = x1
    y2_ref[...] = x2


# ----------------------------------------------------------------------------- params
def make_params(key, in_channels, num_block):
    """Deterministic synthetic parameters (stands in for initialize_weights).

    Conv2d(mid, mid, 1) weight (out, in, 1, 1) is stored pre-transposed as (in, out)
    so the (M, C)-layout reference can do rows @ W.
    """
    cm = in_channels // 2
    keys = jax.random.split(key, 4)
    wf = 0.1 * jax.random.normal(keys[0], (num_block, cm, cm), jnp.float32)
    wg = 0.1 * jax.random.normal(keys[1], (num_block, cm, cm), jnp.float32)
    bf = 0.05 * jax.random.normal(keys[2], (num_block, 1, cm), jnp.float32)
    bg = 0.05 * jax.random.normal(keys[3], (num_block, 1, cm), jnp.float32)
    gf = jnp.full((num_block, 1, cm), 1.0, jnp.float32) + 0.1 * jnp.arange(cm, dtype=jnp.float32)
    gg = jnp.full((num_block, 1, cm), 1.0, jnp.float32) - 0.05 * jnp.arange(cm, dtype=jnp.float32)
    betaf = jnp.full((num_block, 1, cm), 0.02, jnp.float32)
    betag = jnp.full((num_block, 1, cm), -0.03, jnp.float32)
    return dict(wf=wf, bf=bf, gf=gf, betaf=betaf, wg=wg, bg=bg, gg=gg, betag=betag)


# ----------------------------------------------------------------------------- wrapper
def _roll_conv_weights(w, fold):
    """(nb, cm_in, cm_out) conv weights -> (nb, cm_in, cm_out*fold, 1) roll-MAC columns.

    out[k, d, c*fold + p, 0] = w[k, (c - d) % cm, c]   (same for all sub-rows p),
    so that  h = sum_d out[k, d] * roll(x, d*fold, axis=0)  equals the 1x1 conv on
    the channel-major folded layout.
    """
    nb, cm, _ = w.shape
    r = cm * fold
    c_out = np.repeat(np.arange(cm), fold)                 # (r,)  output channel per row
    d = np.arange(cm)[:, None]                             # (cm, 1)
    j = (c_out[None, :] - d) % cm                          # (cm, r) input channel
    co = np.broadcast_to(c_out[None, :], j.shape)          # (cm, r)
    wr = w[:, j, co]                                       # (nb, cm, r) gather
    return wr[..., None].astype(jnp.float32)


def inn_forward(x_nchw, params, num_block, reverse=False, mxu_threshold=128):
    n, c, h, w = x_nchw.shape
    assert c % 2 == 0 and num_block > 0
    cm = c // 2
    m = n * h * w

    # NCHW -> lane-dense (C, M); split halves in the wrapper (layout plumbing).
    xt = jnp.transpose(x_nchw.reshape(n, c, h * w), (1, 0, 2)).reshape(c, m)
    xt = xt.astype(jnp.float32)
    x1, x2 = xt[:cm], xt[cm:]

    use_mxu = cm >= mxu_threshold
    fold = 1
    if (not use_mxu) and cm < 8 and 8 % cm == 0 and m % (8 // cm) == 0:
        fold = 8 // cm                                     # pack sublanes: cm*fold == 8
    r = cm * fold
    mp = m // fold

    if fold > 1:  # channel-major fold: row c*fold+p holds pixels [p*mp, (p+1)*mp) of ch c
        x1 = x1.reshape(cm, fold, mp).reshape(r, mp)
        x2 = x2.reshape(cm, fold, mp).reshape(r, mp)

    if use_mxu:
        # (nb, in, out) -> (nb, out, in) for jnp.dot(W, X).
        wf = jnp.transpose(params["wf"], (0, 2, 1))
        wg = jnp.transpose(params["wg"], (0, 2, 1))
    else:
        wf = _roll_conv_weights(params["wf"], fold)        # (nb, cm, r, 1)
        wg = _roll_conv_weights(params["wg"], fold)

    def expand_affine(p):                                  # (nb, 1, cm) -> (nb, r, 1)
        q = jnp.transpose(p, (0, 2, 1))                    # (nb, cm, 1)
        return jnp.repeat(q, fold, axis=1) if fold > 1 else q

    gf, gg = expand_affine(params["gf"]), expand_affine(params["gg"])
    bef, beg = expand_affine(params["betaf"]), expand_affine(params["betag"])

    # VMEM budget: a handful of live (r, mp) f32 intermediates per block + params.
    per_buf = r * mp * 4
    est = (12 + 2 * num_block) * per_buf + 2 * num_block * r * 8 * 128 * 4
    vmem_limit = int(min(max(est, 16 * 1024 * 1024), 64 * 1024 * 1024))  # 64 MiB: v7x cap

    kernel = functools.partial(inn_kernel, num_block=num_block, reverse=reverse,
                               use_mxu=use_mxu, fold=fold, inv_m=1.0 / float(m))
    vmem = pl.BlockSpec(memory_space=pltpu.MemorySpace.VMEM)
    y1, y2 = pl.pallas_call(
        kernel,
        out_shape=(jax.ShapeDtypeStruct((r, mp), jnp.float32),
                   jax.ShapeDtypeStruct((r, mp), jnp.float32)),
        in_specs=[vmem] * 8,
        out_specs=(vmem, vmem),
        compiler_params=pltpu.CompilerParams(vmem_limit_bytes=vmem_limit),
    )(x1, x2, wf, gf, bef, wg, gg, beg)

    if fold > 1:  # unfold back to (cm, M)
        y1 = y1.reshape(cm, fold, mp).reshape(cm, m)
        y2 = y2.reshape(cm, fold, mp).reshape(cm, m)
    y = jnp.concatenate([y1, y2], axis=0)                  # (C, M) — wrapper-side concat
    return jnp.transpose(y.reshape(c, n, h * w), (1, 0, 2)).reshape(n, c, h, w)


# ----------------------------------------------------------------------------- reference
def _bn_lrelu_ref(h, gamma, beta):
    # Train-mode BatchNorm2d (batch mean, biased batch var, eps=1e-5) + LeakyReLU.
    mean = jnp.mean(h, axis=0, keepdims=True)
    var = jnp.mean((h - mean) ** 2, axis=0, keepdims=True)
    hn = (h - mean) * jax.lax.rsqrt(var + EPS) * gamma + beta
    return jnp.where(hn >= 0, hn, NEG_SLOPE * hn)


def inn_reference(x_nchw, params, num_block, reverse=False):
    """Pure-JAX reference mirroring the PyTorch forward (train-mode BN, with conv bias)."""
    n, c, h, w = x_nchw.shape
    x = jnp.transpose(x_nchw, (0, 2, 3, 1)).reshape(n * h * w, c).astype(jnp.float32)
    cm = c // 2
    x1, x2 = x[:, :cm], x[:, cm:]
    order = range(num_block - 1, -1, -1) if reverse else range(num_block)
    for k in order:
        f = lambda v: _bn_lrelu_ref(v @ params["wf"][k] + params["bf"][k],
                                    params["gf"][k], params["betaf"][k])
        g = lambda v: _bn_lrelu_ref(v @ params["wg"][k] + params["bg"][k],
                                    params["gg"][k], params["betag"][k])
        if reverse:
            y2 = x2 - g(x1)
            y1 = x1 - f(y2)
        else:
            y1 = x1 + f(x2)
            y2 = x2 + g(y1)
        x1, x2 = y1, y2
    y = jnp.concatenate([x1, x2], axis=1)
    return jnp.transpose(y.reshape(n, h, w, c), (0, 3, 1, 2))


# ----------------------------------------------------------------------------- main
if __name__ == "__main__":
    key = jax.random.PRNGKey(0)
    kx1, kp1, kx2, kp2 = jax.random.split(key, 4)

    # Config 1: tiny channels (cm=4) -> folded VPU roll-MAC path; forward and reverse.
    batch, in_channels, spatial, num_block = 2, 8, 16, 2
    x = jax.random.normal(kx1, (batch, in_channels, spatial, spatial), jnp.float32)
    params = make_params(kp1, in_channels, num_block)
    for rev in (False, True):
        y = jax.block_until_ready(inn_forward(x, params, num_block, reverse=rev))
        y_ref = jax.block_until_ready(inn_reference(x, params, num_block, reverse=rev))
        np.testing.assert_allclose(np.asarray(y), np.asarray(y_ref), rtol=2e-5, atol=2e-5)

    # Config 2: force the MXU matmul path (threshold override) to verify it as well.
    b2, c2, s2, nb2 = 2, 16, 8, 3
    x_b = jax.random.normal(kx2, (b2, c2, s2, s2), jnp.float32)
    params_b = make_params(kp2, c2, nb2)
    y_b = jax.block_until_ready(inn_forward(x_b, params_b, nb2, reverse=False, mxu_threshold=8))
    y_b_ref = jax.block_until_ready(inn_reference(x_b, params_b, nb2, reverse=False))
    np.testing.assert_allclose(np.asarray(y_b), np.asarray(y_b_ref), rtol=2e-5, atol=2e-5)

    print("KERNEL_OK")
</pallas_src>

<mosaic_0001>
module attributes {stable_mosaic.version = 11 : i64} {
  func.func @inn_kernel(%arg0: memref<8x256xf32, #tpu.memory_space<vmem>>, %arg1: memref<8x256xf32, #tpu.memory_space<vmem>>, %arg2: memref<2x4x8x1xf32, #tpu.memory_space<vmem>>, %arg3: memref<2x8x1xf32, #tpu.memory_space<vmem>>, %arg4: memref<2x8x1xf32, #tpu.memory_space<vmem>>, %arg5: memref<2x4x8x1xf32, #tpu.memory_space<vmem>>, %arg6: memref<2x8x1xf32, #tpu.memory_space<vmem>>, %arg7: memref<2x8x1xf32, #tpu.memory_space<vmem>>, %arg8: memref<8x256xf32, #tpu.memory_space<vmem>>, %arg9: memref<8x256xf32, #tpu.memory_space<vmem>>) attributes {dimension_semantics = [], scalar_prefetch = 0 : i64, scratch_operands = 0 : i64, tpu.core_type = #tpu.core_type<tc>} {
    %c0 = arith.constant 0 : index
    %c0_0 = arith.constant 0 : index
    %0 = vector.load %arg0[%c0, %c0_0] : memref<8x256xf32, #tpu.memory_space<vmem>>, vector<8x256xf32>
    %c0_1 = arith.constant 0 : index
    %c0_2 = arith.constant 0 : index
    %1 = vector.load %arg1[%c0_1, %c0_2] : memref<8x256xf32, #tpu.memory_space<vmem>>, vector<8x256xf32>
    %c0_3 = arith.constant 0 : index
    %c0_4 = arith.constant 0 : index
    %c0_5 = arith.constant 0 : index
    %c0_6 = arith.constant 0 : index
    %2 = vector.load %arg2[%c0_3, %c0_4, %c0_5, %c0_6] : memref<2x4x8x1xf32, #tpu.memory_space<vmem>>, vector<1x1x8x1xf32>
    %3 = vector.shape_cast %2 : vector<1x1x8x1xf32> to vector<8x1xf32>
    %4 = vector.broadcast %3 : vector<8x1xf32> to vector<8x256xf32>
    %5 = arith.mulf %4, %1 : vector<8x256xf32>
    %c0_7 = arith.constant 0 : index
    %c1 = arith.constant 1 : index
    %c0_8 = arith.constant 0 : index
    %c0_9 = arith.constant 0 : index
    %6 = vector.load %arg2[%c0_7, %c1, %c0_8, %c0_9] : memref<2x4x8x1xf32, #tpu.memory_space<vmem>>, vector<1x1x8x1xf32>
    %7 = vector.shape_cast %6 : vector<1x1x8x1xf32> to vector<8x1xf32>
    %8 = vector.extract_strided_slice %1 {offsets = [6, 0], sizes = [2, 256], strides = [1, 1]} : vector<8x256xf32> to vector<2x256xf32>
    %9 = vector.extract_strided_slice %1 {offsets = [0, 0], sizes = [6, 256], strides = [1, 1]} : vector<8x256xf32> to vector<6x256xf32>
    %10 = tpu.concatenate %8, %9 in 0 : vector<2x256xf32>, vector<6x256xf32> -> vector<8x256xf32>
    %11 = vector.broadcast %7 : vector<8x1xf32> to vector<8x256xf32>
    %12 = arith.mulf %11, %10 : vector<8x256xf32>
    %13 = arith.addf %5, %12 : vector<8x256xf32>
    %c0_10 = arith.constant 0 : index
    %c2 = arith.constant 2 : index
    %c0_11 = arith.constant 0 : index
    %c0_12 = arith.constant 0 : index
    %14 = vector.load %arg2[%c0_10, %c2, %c0_11, %c0_12] : memref<2x4x8x1xf32, #tpu.memory_space<vmem>>, vector<1x1x8x1xf32>
    %15 = vector.shape_cast %14 : vector<1x1x8x1xf32> to vector<8x1xf32>
    %16 = vector.extract_strided_slice %1 {offsets = [4, 0], sizes = [4, 256], strides = [1, 1]} : vector<8x256xf32> to vector<4x256xf32>
    %17 = vector.extract_strided_slice %1 {offsets = [0, 0], sizes = [4, 256], strides = [1, 1]} : vector<8x256xf32> to vector<4x256xf32>
    %18 = tpu.concatenate %16, %17 in 0 : vector<4x256xf32>, vector<4x256xf32> -> vector<8x256xf32>
    %19 = vector.broadcast %15 : vector<8x1xf32> to vector<8x256xf32>
    %20 = arith.mulf %19, %18 : vector<8x256xf32>
    %21 = arith.addf %13, %20 : vector<8x256xf32>
    %c0_13 = arith.constant 0 : index
    %c3 = arith.constant 3 : index
    %c0_14 = arith.constant 0 : index
    %c0_15 = arith.constant 0 : index
    %22 = vector.load %arg2[%c0_13, %c3, %c0_14, %c0_15] : memref<2x4x8x1xf32, #tpu.memory_space<vmem>>, vector<1x1x8x1xf32>
    %23 = vector.shape_cast %22 : vector<1x1x8x1xf32> to vector<8x1xf32>
    %24 = vector.extract_strided_slice %1 {offsets = [2, 0], sizes = [6, 256], strides = [1, 1]} : vector<8x256xf32> to vector<6x256xf32>
    %25 = vector.extract_strided_slice %1 {offsets = [0, 0], sizes = [2, 256], strides = [1, 1]} : vector<8x256xf32> to vector<2x256xf32>
    %26 = tpu.concatenate %24, %25 in 0 : vector<6x256xf32>, vector<2x256xf32> -> vector<8x256xf32>
    %27 = vector.broadcast %23 : vector<8x1xf32> to vector<8x256xf32>
    %28 = arith.mulf %27, %26 : vector<8x256xf32>
    %29 = arith.addf %21, %28 : vector<8x256xf32>
    %cst = arith.constant dense<0.000000e+00> : vector<8xf32>
    %30 = vector.multi_reduction <add>, %29, %cst [1] : vector<8x256xf32> to vector<8xf32>
    %31 = vector.shape_cast %30 : vector<8xf32> to vector<8x1xf32>
    %32 = vector.extract_strided_slice %31 {offsets = [0, 0], sizes = [2, 1], strides = [1, 1]} : vector<8x1xf32> to vector<2x1xf32>
    %cst_16 = arith.constant dense<0.000000e+00> : vector<1xf32>
    %33 = vector.multi_reduction <add>, %32, %cst_16 [0] : vector<2x1xf32> to vector<1xf32>
    %34 = vector.shape_cast %33 : vector<1xf32> to vector<1x1xf32>
    %35 = vector.shape_cast %34 : vector<1x1xf32> to vector<1x1xf32>
    %36 = vector.broadcast %35 : vector<1x1xf32> to vector<2x1xf32>
    %37 = vector.extract_strided_slice %31 {offsets = [2, 0], sizes = [2, 1], strides = [1, 1]} : vector<8x1xf32> to vector<2x1xf32>
    %cst_17 = arith.constant dense<0.000000e+00> : vector<1xf32>
    %38 = vector.multi_reduction <add>, %37, %cst_17 [0] : vector<2x1xf32> to vector<1xf32>
    %39 = vector.shape_cast %38 : vector<1xf32> to vector<1x1xf32>
    %40 = vector.shape_cast %39 : vector<1x1xf32> to vector<1x1xf32>
    %41 = vector.broadcast %40 : vector<1x1xf32> to vector<2x1xf32>
    %42 = vector.extract_strided_slice %31 {offsets = [4, 0], sizes = [2, 1], strides = [1, 1]} : vector<8x1xf32> to vector<2x1xf32>
    %cst_18 = arith.constant dense<0.000000e+00> : vector<1xf32>
    %43 = vector.multi_reduction <add>, %42, %cst_18 [0] : vector<2x1xf32> to vector<1xf32>
    %44 = vector.shape_cast %43 : vector<1xf32> to vector<1x1xf32>
    %45 = vector.shape_cast %44 : vector<1x1xf32> to vector<1x1xf32>
    %46 = vector.broadcast %45 : vector<1x1xf32> to vector<2x1xf32>
    %47 = vector.extract_strided_slice %31 {offsets = [6, 0], sizes = [2, 1], strides = [1, 1]} : vector<8x1xf32> to vector<2x1xf32>
    %cst_19 = arith.constant dense<0.000000e+00> : vector<1xf32>
    %48 = vector.multi_reduction <add>, %47, %cst_19 [0] : vector<2x1xf32> to vector<1xf32>
    %49 = vector.shape_cast %48 : vector<1xf32> to vector<1x1xf32>
    %50 = vector.shape_cast %49 : vector<1x1xf32> to vector<1x1xf32>
    %51 = vector.broadcast %50 : vector<1x1xf32> to vector<2x1xf32>
    %52 = tpu.concatenate %36, %41, %46, %51 in 0 : vector<2x1xf32>, vector<2x1xf32>, vector<2x1xf32>, vector<2x1xf32> -> vector<8x1xf32>
    %53 = arith.mulf %29, %29 : vector<8x256xf32>
    %cst_20 = arith.constant dense<0.000000e+00> : vector<8xf32>
    %54 = vector.multi_reduction <add>, %53, %cst_20 [1] : vector<8x256xf32> to vector<8xf32>
    %55 = vector.shape_cast %54 : vector<8xf32> to vector<8x1xf32>
    %56 = vector.extract_strided_slice %55 {offsets = [0, 0], sizes = [2, 1], strides = [1, 1]} : vector<8x1xf32> to vector<2x1xf32>
    %cst_21 = arith.constant dense<0.000000e+00> : vector<1xf32>
    %57 = vector.multi_reduction <add>, %56, %cst_21 [0] : vector<2x1xf32> to vector<1xf32>
    %58 = vector.shape_cast %57 : vector<1xf32> to vector<1x1xf32>
    %59 = vector.shape_cast %58 : vector<1x1xf32> to vector<1x1xf32>
    %60 = vector.broadcast %59 : vector<1x1xf32> to vector<2x1xf32>
    %61 = vector.extract_strided_slice %55 {offsets = [2, 0], sizes = [2, 1], strides = [1, 1]} : vector<8x1xf32> to vector<2x1xf32>
    %cst_22 = arith.constant dense<0.000000e+00> : vector<1xf32>
    %62 = vector.multi_reduction <add>, %61, %cst_22 [0] : vector<2x1xf32> to vector<1xf32>
    %63 = vector.shape_cast %62 : vector<1xf32> to vector<1x1xf32>
    %64 = vector.shape_cast %63 : vector<1x1xf32> to vector<1x1xf32>
    %65 = vector.broadcast %64 : vector<1x1xf32> to vector<2x1xf32>
    %66 = vector.extract_strided_slice %55 {offsets = [4, 0], sizes = [2, 1], strides = [1, 1]} : vector<8x1xf32> to vector<2x1xf32>
    %cst_23 = arith.constant dense<0.000000e+00> : vector<1xf32>
    %67 = vector.multi_reduction <add>, %66, %cst_23 [0] : vector<2x1xf32> to vector<1xf32>
    %68 = vector.shape_cast %67 : vector<1xf32> to vector<1x1xf32>
    %69 = vector.shape_cast %68 : vector<1x1xf32> to vector<1x1xf32>
    %70 = vector.broadcast %69 : vector<1x1xf32> to vector<2x1xf32>
    %71 = vector.extract_strided_slice %55 {offsets = [6, 0], sizes = [2, 1], strides = [1, 1]} : vector<8x1xf32> to vector<2x1xf32>
    %cst_24 = arith.constant dense<0.000000e+00> : vector<1xf32>
    %72 = vector.multi_reduction <add>, %71, %cst_24 [0] : vector<2x1xf32> to vector<1xf32>
    %73 = vector.shape_cast %72 : vector<1xf32> to vector<1x1xf32>
    %74 = vector.shape_cast %73 : vector<1x1xf32> to vector<1x1xf32>
    %75 = vector.broadcast %74 : vector<1x1xf32> to vector<2x1xf32>
    %76 = tpu.concatenate %60, %65, %70, %75 in 0 : vector<2x1xf32>, vector<2x1xf32>, vector<2x1xf32>, vector<2x1xf32> -> vector<8x1xf32>
    %cst_25 = arith.constant 0.001953125 : f32
    %77 = vector.broadcast %cst_25 : f32 to vector<8x1xf32>
    %78 = arith.mulf %52, %77 : vector<8x1xf32>
    %cst_26 = arith.constant 0.001953125 : f32
    %79 = vector.broadcast %cst_26 : f32 to vector<8x1xf32>
    %80 = arith.mulf %76, %79 : vector<8x1xf32>
    %81 = arith.mulf %78, %78 : vector<8x1xf32>
    %82 = arith.subf %80, %81 : vector<8x1xf32>
    %c0_27 = arith.constant 0 : index
    %c0_28 = arith.constant 0 : index
    %c0_29 = arith.constant 0 : index
    %83 = vector.load %arg3[%c0_27, %c0_28, %c0_29] : memref<2x8x1xf32, #tpu.memory_space<vmem>>, vector<1x8x1xf32>
    %84 = vector.shape_cast %83 : vector<1x8x1xf32> to vector<8x1xf32>
    %cst_30 = arith.constant 9.99999974E-6 : f32
    %85 = vector.broadcast %cst_30 : f32 to vector<8x1xf32>
    %86 = arith.addf %82, %85 : vector<8x1xf32>
    %87 = math.rsqrt %86 : vector<8x1xf32>
    %88 = arith.mulf %84, %87 : vector<8x1xf32>
    %c0_31 = arith.constant 0 : index
    %c0_32 = arith.constant 0 : index
    %c0_33 = arith.constant 0 : index
    %89 = vector.load %arg4[%c0_31, %c0_32, %c0_33] : memref<2x8x1xf32, #tpu.memory_space<vmem>>, vector<1x8x1xf32>
    %90 = vector.shape_cast %89 : vector<1x8x1xf32> to vector<8x1xf32>
    %91 = arith.mulf %78, %88 : vector<8x1xf32>
    %92 = arith.subf %90, %91 : vector<8x1xf32>
    %93 = vector.broadcast %88 : vector<8x1xf32> to vector<8x256xf32>
    %94 = arith.mulf %29, %93 : vector<8x256xf32>
    %95 = vector.broadcast %92 : vector<8x1xf32> to vector<8x256xf32>
    %96 = arith.addf %94, %95 : vector<8x256xf32>
    %cst_34 = arith.constant 0.000000e+00 : f32
    %97 = vector.broadcast %cst_34 : f32 to vector<8x256xf32>
    %98 = arith.cmpf oge, %96, %97 : vector<8x256xf32>
    %cst_35 = arith.constant 0.00999999977 : f32
    %99 = vector.broadcast %cst_35 : f32 to vector<8x256xf32>
    %100 = arith.mulf %99, %96 : vector<8x256xf32>
    %101 = arith.select %98, %96, %100 : vector<8x256xi1>, vector<8x256xf32>
    %102 = arith.addf %0, %101 : vector<8x256xf32>
    %c0_36 = arith.constant 0 : index
    %c0_37 = arith.constant 0 : index
    %c0_38 = arith.constant 0 : index
    %c0_39 = arith.constant 0 : index
    %103 = vector.load %arg5[%c0_36, %c0_37, %c0_38, %c0_39] : memref<2x4x8x1xf32, #tpu.memory_space<vmem>>, vector<1x1x8x1xf32>
    %104 = vector.shape_cast %103 : vector<1x1x8x1xf32> to vector<8x1xf32>
    %105 = vector.broadcast %104 : vector<8x1xf32> to vector<8x256xf32>
    %106 = arith.mulf %105, %102 : vector<8x256xf32>
    %c0_40 = arith.constant 0 : index
    %c1_41 = arith.constant 1 : index
    %c0_42 = arith.constant 0 : index
    %c0_43 = arith.constant 0 : index
    %107 = vector.load %arg5[%c0_40, %c1_41, %c0_42, %c0_43] : memref<2x4x8x1xf32, #tpu.memory_space<vmem>>, vector<1x1x8x1xf32>
    %108 = vector.shape_cast %107 : vector<1x1x8x1xf32> to vector<8x1xf32>
    %109 = vector.extract_strided_slice %102 {offsets = [6, 0], sizes = [2, 256], strides = [1, 1]} : vector<8x256xf32> to vector<2x256xf32>
    %110 = vector.extract_strided_slice %102 {offsets = [0, 0], sizes = [6, 256], strides = [1, 1]} : vector<8x256xf32> to vector<6x256xf32>
    %111 = tpu.concatenate %109, %110 in 0 : vector<2x256xf32>, vector<6x256xf32> -> vector<8x256xf32>
    %112 = vector.broadcast %108 : vector<8x1xf32> to vector<8x256xf32>
    %113 = arith.mulf %112, %111 : vector<8x256xf32>
    %114 = arith.addf %106, %113 : vector<8x256xf32>
    %c0_44 = arith.constant 0 : index
    %c2_45 = arith.constant 2 : index
    %c0_46 = arith.constant 0 : index
    %c0_47 = arith.constant 0 : index
    %115 = vector.load %arg5[%c0_44, %c2_45, %c0_46, %c0_47] : memref<2x4x8x1xf32, #tpu.memory_space<vmem>>, vector<1x1x8x1xf32>
    %116 = vector.shape_cast %115 : vector<1x1x8x1xf32> to vector<8x1xf32>
    %117 = vector.extract_strided_slice %102 {offsets = [4, 0], sizes = [4, 256], strides = [1, 1]} : vector<8x256xf32> to vector<4x256xf32>
    %118 = vector.extract_strided_slice %102 {offsets = [0, 0], sizes = [4, 256], strides = [1, 1]} : vector<8x256xf32> to vector<4x256xf32>
    %119 = tpu.concatenate %117, %118 in 0 : vector<4x256xf32>, vector<4x256xf32> -> vector<8x256xf32>
    %120 = vector.broadcast %116 : vector<8x1xf32> to vector<8x256xf32>
    %121 = arith.mulf %120, %119 : vector<8x256xf32>
    %122 = arith.addf %114, %121 : vector<8x256xf32>
    %c0_48 = arith.constant 0 : index
    %c3_49 = arith.constant 3 : index
    %c0_50 = arith.constant 0 : index
    %c0_51 = arith.constant 0 : index
    %123 = vector.load %arg5[%c0_48, %c3_49, %c0_50, %c0_51] : memref<2x4x8x1xf32, #tpu.memory_space<vmem>>, vector<1x1x8x1xf32>
    %124 = vector.shape_cast %123 : vector<1x1x8x1xf32> to vector<8x1xf32>
    %125 = vector.extract_strided_slice %102 {offsets = [2, 0], sizes = [6, 256], strides = [1, 1]} : vector<8x256xf32> to vector<6x256xf32>
    %126 = vector.extract_strided_slice %102 {offsets = [0, 0], sizes = [2, 256], strides = [1, 1]} : vector<8x256xf32> to vector<2x256xf32>
    %127 = tpu.concatenate %125, %126 in 0 : vector<6x256xf32>, vector<2x256xf32> -> vector<8x256xf32>
    %128 = vector.broadcast %124 : vector<8x1xf32> to vector<8x256xf32>
    %129 = arith.mulf %128, %127 : vector<8x256xf32>
    %130 = arith.addf %122, %129 : vector<8x256xf32>
    %cst_52 = arith.constant dense<0.000000e+00> : vector<8xf32>
    %131 = vector.multi_reduction <add>, %130, %cst_52 [1] : vector<8x256xf32> to vector<8xf32>
    %132 = vector.shape_cast %131 : vector<8xf32> to vector<8x1xf32>
    %133 = vector.extract_strided_slice %132 {offsets = [0, 0], sizes = [2, 1], strides = [1, 1]} : vector<8x1xf32> to vector<2x1xf32>
    %cst_53 = arith.constant dense<0.000000e+00> : vector<1xf32>
    %134 = vector.multi_reduction <add>, %133, %cst_53 [0] : vector<2x1xf32> to vector<1xf32>
    %135 = vector.shape_cast %134 : vector<1xf32> to vector<1x1xf32>
    %136 = vector.shape_cast %135 : vector<1x1xf32> to vector<1x1xf32>
    %137 = vector.broadcast %136 : vector<1x1xf32> to vector<2x1xf32>
    %138 = vector.extract_strided_slice %132 {offsets = [2, 0], sizes = [2, 1], strides = [1, 1]} : vector<8x1xf32> to vector<2x1xf32>
    %cst_54 = arith.constant dense<0.000000e+00> : vector<1xf32>
    %139 = vector.multi_reduction <add>, %138, %cst_54 [0] : vector<2x1xf32> to vector<1xf32>
    %140 = vector.shape_cast %139 : vector<1xf32> to vector<1x1xf32>
    %141 = vector.shape_cast %140 : vector<1x1xf32> to vector<1x1xf32>
    %142 = vector.broadcast %141 : vector<1x1xf32> to vector<2x1xf32>
    %143 = vector.extract_strided_slice %132 {offsets = [4, 0], sizes = [2, 1], strides = [1, 1]} : vector<8x1xf32> to vector<2x1xf32>
    %cst_55 = arith.constant dense<0.000000e+00> : vector<1xf32>
    %144 = vector.multi_reduction <add>, %143, %cst_55 [0] : vector<2x1xf32> to vector<1xf32>
    %145 = vector.shape_cast %144 : vector<1xf32> to vector<1x1xf32>
    %146 = vector.shape_cast %145 : vector<1x1xf32> to vector<1x1xf32>
    %147 = vector.broadcast %146 : vector<1x1xf32> to vector<2x1xf32>
    %148 = vector.extract_strided_slice %132 {offsets = [6, 0], sizes = [2, 1], strides = [1, 1]} : vector<8x1xf32> to vector<2x1xf32>
    %cst_56 = arith.constant dense<0.000000e+00> : vector<1xf32>
    %149 = vector.multi_reduction <add>, %148, %cst_56 [0] : vector<2x1xf32> to vector<1xf32>
    %150 = vector.shape_cast %149 : vector<1xf32> to vector<1x1xf32>
    %151 = vector.shape_cast %150 : vector<1x1xf32> to vector<1x1xf32>
    %152 = vector.broadcast %151 : vector<1x1xf32> to vector<2x1xf32>
    %153 = tpu.concatenate %137, %142, %147, %152 in 0 : vector<2x1xf32>, vector<2x1xf32>, vector<2x1xf32>, vector<2x1xf32> -> vector<8x1xf32>
    %154 = arith.mulf %130, %130 : vector<8x256xf32>
    %cst_57 = arith.constant dense<0.000000e+00> : vector<8xf32>
    %155 = vector.multi_reduction <add>, %154, %cst_57 [1] : vector<8x256xf32> to vector<8xf32>
    %156 = vector.shape_cast %155 : vector<8xf32> to vector<8x1xf32>
    %157 = vector.extract_strided_slice %156 {offsets = [0, 0], sizes = [2, 1], strides = [1, 1]} : vector<8x1xf32> to vector<2x1xf32>
    %cst_58 = arith.constant dense<0.000000e+00> : vector<1xf32>
    %158 = vector.multi_reduction <add>, %157, %cst_58 [0] : vector<2x1xf32> to vector<1xf32>
    %159 = vector.shape_cast %158 : vector<1xf32> to vector<1x1xf32>
    %160 = vector.shape_cast %159 : vector<1x1xf32> to vector<1x1xf32>
    %161 = vector.broadcast %160 : vector<1x1xf32> to vector<2x1xf32>
    %162 = vector.extract_strided_slice %156 {offsets = [2, 0], sizes = [2, 1], strides = [1, 1]} : vector<8x1xf32> to vector<2x1xf32>
    %cst_59 = arith.constant dense<0.000000e+00> : vector<1xf32>
    %163 = vector.multi_reduction <add>, %162, %cst_59 [0] : vector<2x1xf32> to vector<1xf32>
    %164 = vector.shape_cast %163 : vector<1xf32> to vector<1x1xf32>
    %165 = vector.shape_cast %164 : vector<1x1xf32> to vector<1x1xf32>
    %166 = vector.broadcast %165 : vector<1x1xf32> to vector<2x1xf32>
    %167 = vector.extract_strided_slice %156 {offsets = [4, 0], sizes = [2, 1], strides = [1, 1]} : vector<8x1xf32> to vector<2x1xf32>
    %cst_60 = arith.constant dense<0.000000e+00> : vector<1xf32>
    %168 = vector.multi_reduction <add>, %167, %cst_60 [0] : vector<2x1xf32> to vector<1xf32>
    %169 = vector.shape_cast %168 : vector<1xf32> to vector<1x1xf32>
    %170 = vector.shape_cast %169 : vector<1x1xf32> to vector<1x1xf32>
    %171 = vector.broadcast %170 : vector<1x1xf32> to vector<2x1xf32>
    %172 = vector.extract_strided_slice %156 {offsets = [6, 0], sizes = [2, 1], strides = [1, 1]} : vector<8x1xf32> to vector<2x1xf32>
    %cst_61 = arith.constant dense<0.000000e+00> : vector<1xf32>
    %173 = vector.multi_reduction <add>, %172, %cst_61 [0] : vector<2x1xf32> to vector<1xf32>
    %174 = vector.shape_cast %173 : vector<1xf32> to vector<1x1xf32>
    %175 = vector.shape_cast %174 : vector<1x1xf32> to vector<1x1xf32>
    %176 = vector.broadcast %175 : vector<1x1xf32> to vector<2x1xf32>
    %177 = tpu.concatenate %161, %166, %171, %176 in 0 : vector<2x1xf32>, vector<2x1xf32>, vector<2x1xf32>, vector<2x1xf32> -> vector<8x1xf32>
    %cst_62 = arith.constant 0.001953125 : f32
    %178 = vector.broadcast %cst_62 : f32 to vector<8x1xf32>
    %179 = arith.mulf %153, %178 : vector<8x1xf32>
    %cst_63 = arith.constant 0.001953125 : f32
    %180 = vector.broadcast %cst_63 : f32 to vector<8x1xf32>
    %181 = arith.mulf %177, %180 : vector<8x1xf32>
    %182 = arith.mulf %179, %179 : vector<8x1xf32>
    %183 = arith.subf %181, %182 : vector<8x1xf32>
    %c0_64 = arith.constant 0 : index
    %c0_65 = arith.constant 0 : index
    %c0_66 = arith.constant 0 : index
    %184 = vector.load %arg6[%c0_64, %c0_65, %c0_66] : memref<2x8x1xf32, #tpu.memory_space<vmem>>, vector<1x8x1xf32>
    %185 = vector.shape_cast %184 : vector<1x8x1xf32> to vector<8x1xf32>
    %cst_67 = arith.constant 9.99999974E-6 : f32
    %186 = vector.broadcast %cst_67 : f32 to vector<8x1xf32>
    %187 = arith.addf %183, %186 : vector<8x1xf32>
    %188 = math.rsqrt %187 : vector<8x1xf32>
    %189 = arith.mulf %185, %188 : vector<8x1xf32>
    %c0_68 = arith.constant 0 : index
    %c0_69 = arith.constant 0 : index
    %c0_70 = arith.constant 0 : index
    %190 = vector.load %arg7[%c0_68, %c0_69, %c0_70] : memref<2x8x1xf32, #tpu.memory_space<vmem>>, vector<1x8x1xf32>
    %191 = vector.shape_cast %190 : vector<1x8x1xf32> to vector<8x1xf32>
    %192 = arith.mulf %179, %189 : vector<8x1xf32>
    %193 = arith.subf %191, %192 : vector<8x1xf32>
    %194 = vector.broadcast %189 : vector<8x1xf32> to vector<8x256xf32>
    %195 = arith.mulf %130, %194 : vector<8x256xf32>
    %196 = vector.broadcast %193 : vector<8x1xf32> to vector<8x256xf32>
    %197 = arith.addf %195, %196 : vector<8x256xf32>
    %cst_71 = arith.constant 0.000000e+00 : f32
    %198 = vector.broadcast %cst_71 : f32 to vector<8x256xf32>
    %199 = arith.cmpf oge, %197, %198 : vector<8x256xf32>
    %cst_72 = arith.constant 0.00999999977 : f32
    %200 = vector.broadcast %cst_72 : f32 to vector<8x256xf32>
    %201 = arith.mulf %200, %197 : vector<8x256xf32>
    %202 = arith.select %199, %197, %201 : vector<8x256xi1>, vector<8x256xf32>
    %203 = arith.addf %1, %202 : vector<8x256xf32>
    %c1_73 = arith.constant 1 : index
    %c0_74 = arith.constant 0 : index
    %c0_75 = arith.constant 0 : index
    %c0_76 = arith.constant 0 : index
    %204 = vector.load %arg2[%c1_73, %c0_74, %c0_75, %c0_76] : memref<2x4x8x1xf32, #tpu.memory_space<vmem>>, vector<1x1x8x1xf32>
    %205 = vector.shape_cast %204 : vector<1x1x8x1xf32> to vector<8x1xf32>
    %206 = vector.broadcast %205 : vector<8x1xf32> to vector<8x256xf32>
    %207 = arith.mulf %206, %203 : vector<8x256xf32>
    %c1_77 = arith.constant 1 : index
    %c1_78 = arith.constant 1 : index
    %c0_79 = arith.constant 0 : index
    %c0_80 = arith.constant 0 : index
    %208 = vector.load %arg2[%c1_77, %c1_78, %c0_79, %c0_80] : memref<2x4x8x1xf32, #tpu.memory_space<vmem>>, vector<1x1x8x1xf32>
    %209 = vector.shape_cast %208 : vector<1x1x8x1xf32> to vector<8x1xf32>
    %210 = vector.extract_strided_slice %203 {offsets = [6, 0], sizes = [2, 256], strides = [1, 1]} : vector<8x256xf32> to vector<2x256xf32>
    %211 = vector.extract_strided_slice %203 {offsets = [0, 0], sizes = [6, 256], strides = [1, 1]} : vector<8x256xf32> to vector<6x256xf32>
    %212 = tpu.concatenate %210, %211 in 0 : vector<2x256xf32>, vector<6x256xf32> -> vector<8x256xf32>
    %213 = vector.broadcast %209 : vector<8x1xf32> to vector<8x256xf32>
    %214 = arith.mulf %213, %212 : vector<8x256xf32>
    %215 = arith.addf %207, %214 : vector<8x256xf32>
    %c1_81 = arith.constant 1 : index
    %c2_82 = arith.constant 2 : index
    %c0_83 = arith.constant 0 : index
    %c0_84 = arith.constant 0 : index
    %216 = vector.load %arg2[%c1_81, %c2_82, %c0_83, %c0_84] : memref<2x4x8x1xf32, #tpu.memory_space<vmem>>, vector<1x1x8x1xf32>
    %217 = vector.shape_cast %216 : vector<1x1x8x1xf32> to vector<8x1xf32>
    %218 = vector.extract_strided_slice %203 {offsets = [4, 0], sizes = [4, 256], strides = [1, 1]} : vector<8x256xf32> to vector<4x256xf32>
    %219 = vector.extract_strided_slice %203 {offsets = [0, 0], sizes = [4, 256], strides = [1, 1]} : vector<8x256xf32> to vector<4x256xf32>
    %220 = tpu.concatenate %218, %219 in 0 : vector<4x256xf32>, vector<4x256xf32> -> vector<8x256xf32>
    %221 = vector.broadcast %217 : vector<8x1xf32> to vector<8x256xf32>
    %222 = arith.mulf %221, %220 : vector<8x256xf32>
    %223 = arith.addf %215, %222 : vector<8x256xf32>
    %c1_85 = arith.constant 1 : index
    %c3_86 = arith.constant 3 : index
    %c0_87 = arith.constant 0 : index
    %c0_88 = arith.constant 0 : index
    %224 = vector.load %arg2[%c1_85, %c3_86, %c0_87, %c0_88] : memref<2x4x8x1xf32, #tpu.memory_space<vmem>>, vector<1x1x8x1xf32>
    %225 = vector.shape_cast %224 : vector<1x1x8x1xf32> to vector<8x1xf32>
    %226 = vector.extract_strided_slice %203 {offsets = [2, 0], sizes = [6, 256], strides = [1, 1]} : vector<8x256xf32> to vector<6x256xf32>
    %227 = vector.extract_strided_slice %203 {offsets = [0, 0], sizes = [2, 256], strides = [1, 1]} : vector<8x256xf32> to vector<2x256xf32>
    %228 = tpu.concatenate %226, %227 in 0 : vector<6x256xf32>, vector<2x256xf32> -> vector<8x256xf32>
    %229 = vector.broadcast %225 : vector<8x1xf32> to vector<8x256xf32>
    %230 = arith.mulf %229, %228 : vector<8x256xf32>
    %231 = arith.addf %223, %230 : vector<8x256xf32>
    %cst_89 = arith.constant dense<0.000000e+00> : vector<8xf32>
    %232 = vector.multi_reduction <add>, %231, %cst_89 [1] : vector<8x256xf32> to vector<8xf32>
    %233 = vector.shape_cast %232 : vector<8xf32> to vector<8x1xf32>
    %234 = vector.extract_strided_slice %233 {offsets = [0, 0], sizes = [2, 1], strides = [1, 1]} : vector<8x1xf32> to vector<2x1xf32>
    %cst_90 = arith.constant dense<0.000000e+00> : vector<1xf32>
    %235 = vector.multi_reduction <add>, %234, %cst_90 [0] : vector<2x1xf32> to vector<1xf32>
    %236 = vector.shape_cast %235 : vector<1xf32> to vector<1x1xf32>
    %237 = vector.shape_cast %236 : vector<1x1xf32> to vector<1x1xf32>
    %238 = vector.broadcast %237 : vector<1x1xf32> to vector<2x1xf32>
    %239 = vector.extract_strided_slice %233 {offsets = [2, 0], sizes = [2, 1], strides = [1, 1]} : vector<8x1xf32> to vector<2x1xf32>
    %cst_91 = arith.constant dense<0.000000e+00> : vector<1xf32>
    %240 = vector.multi_reduction <add>, %239, %cst_91 [0] : vector<2x1xf32> to vector<1xf32>
    %241 = vector.shape_cast %240 : vector<1xf32> to vector<1x1xf32>
    %242 = vector.shape_cast %241 : vector<1x1xf32> to vector<1x1xf32>
    %243 = vector.broadcast %242 : vector<1x1xf32> to vector<2x1xf32>
    %244 = vector.extract_strided_slice %233 {offsets = [4, 0], sizes = [2, 1], strides = [1, 1]} : vector<8x1xf32> to vector<2x1xf32>
    %cst_92 = arith.constant dense<0.000000e+00> : vector<1xf32>
    %245 = vector.multi_reduction <add>, %244, %cst_92 [0] : vector<2x1xf32> to vector<1xf32>
    %246 = vector.shape_cast %245 : vector<1xf32> to vector<1x1xf32>
    %247 = vector.shape_cast %246 : vector<1x1xf32> to vector<1x1xf32>
    %248 = vector.broadcast %247 : vector<1x1xf32> to vector<2x1xf32>
    %249 = vector.extract_strided_slice %233 {offsets = [6, 0], sizes = [2, 1], strides = [1, 1]} : vector<8x1xf32> to vector<2x1xf32>
    %cst_93 = arith.constant dense<0.000000e+00> : vector<1xf32>
    %250 = vector.multi_reduction <add>, %249, %cst_93 [0] : vector<2x1xf32> to vector<1xf32>
    %251 = vector.shape_cast %250 : vector<1xf32> to vector<1x1xf32>
    %252 = vector.shape_cast %251 : vector<1x1xf32> to vector<1x1xf32>
    %253 = vector.broadcast %252 : vector<1x1xf32> to vector<2x1xf32>
    %254 = tpu.concatenate %238, %243, %248, %253 in 0 : vector<2x1xf32>, vector<2x1xf32>, vector<2x1xf32>, vector<2x1xf32> -> vector<8x1xf32>
    %255 = arith.mulf %231, %231 : vector<8x256xf32>
    %cst_94 = arith.constant dense<0.000000e+00> : vector<8xf32>
    %256 = vector.multi_reduction <add>, %255, %cst_94 [1] : vector<8x256xf32> to vector<8xf32>
    %257 = vector.shape_cast %256 : vector<8xf32> to vector<8x1xf32>
    %258 = vector.extract_strided_slice %257 {offsets = [0, 0], sizes = [2, 1], strides = [1, 1]} : vector<8x1xf32> to vector<2x1xf32>
    %cst_95 = arith.constant dense<0.000000e+00> : vector<1xf32>
    %259 = vector.multi_reduction <add>, %258, %cst_95 [0] : vector<2x1xf32> to vector<1xf32>
    %260 = vector.shape_cast %259 : vector<1xf32> to vector<1x1xf32>
    %261 = vector.shape_cast %260 : vector<1x1xf32> to vector<1x1xf32>
    %262 = vector.broadcast %261 : vector<1x1xf32> to vector<2x1xf32>
    %263 = vector.extract_strided_slice %257 {offsets = [2, 0], sizes = [2, 1], strides = [1, 1]} : vector<8x1xf32> to vector<2x1xf32>
    %cst_96 = arith.constant dense<0.000000e+00> : vector<1xf32>
    %264 = vector.multi_reduction <add>, %263, %cst_96 [0] : vector<2x1xf32> to vector<1xf32>
    %265 = vector.shape_cast %264 : vector<1xf32> to vector<1x1xf32>
    %266 = vector.shape_cast %265 : vector<1x1xf32> to vector<1x1xf32>
    %267 = vector.broadcast %266 : vector<1x1xf32> to vector<2x1xf32>
    %268 = vector.extract_strided_slice %257 {offsets = [4, 0], sizes = [2, 1], strides = [1, 1]} : vector<8x1xf32> to vector<2x1xf32>
    %cst_97 = arith.constant dense<0.000000e+00> : vector<1xf32>
    %269 = vector.multi_reduction <add>, %268, %cst_97 [0] : vector<2x1xf32> to vector<1xf32>
    %270 = vector.shape_cast %269 : vector<1xf32> to vector<1x1xf32>
    %271 = vector.shape_cast %270 : vector<1x1xf32> to vector<1x1xf32>
    %272 = vector.broadcast %271 : vector<1x1xf32> to vector<2x1xf32>
    %273 = vector.extract_strided_slice %257 {offsets = [6, 0], sizes = [2, 1], strides = [1, 1]} : vector<8x1xf32> to vector<2x1xf32>
    %cst_98 = arith.constant dense<0.000000e+00> : vector<1xf32>
    %274 = vector.multi_reduction <add>, %273, %cst_98 [0] : vector<2x1xf32> to vector<1xf32>
    %275 = vector.shape_cast %274 : vector<1xf32> to vector<1x1xf32>
    %276 = vector.shape_cast %275 : vector<1x1xf32> to vector<1x1xf32>
    %277 = vector.broadcast %276 : vector<1x1xf32> to vector<2x1xf32>
    %278 = tpu.concatenate %262, %267, %272, %277 in 0 : vector<2x1xf32>, vector<2x1xf32>, vector<2x1xf32>, vector<2x1xf32> -> vector<8x1xf32>
    %cst_99 = arith.constant 0.001953125 : f32
    %279 = vector.broadcast %cst_99 : f32 to vector<8x1xf32>
    %280 = arith.mulf %254, %279 : vector<8x1xf32>
    %cst_100 = arith.constant 0.001953125 : f32
    %281 = vector.broadcast %cst_100 : f32 to vector<8x1xf32>
    %282 = arith.mulf %278, %281 : vector<8x1xf32>
    %283 = arith.mulf %280, %280 : vector<8x1xf32>
    %284 = arith.subf %282, %283 : vector<8x1xf32>
    %c1_101 = arith.constant 1 : index
    %c0_102 = arith.constant 0 : index
    %c0_103 = arith.constant 0 : index
    %285 = vector.load %arg3[%c1_101, %c0_102, %c0_103] : memref<2x8x1xf32, #tpu.memory_space<vmem>>, vector<1x8x1xf32>
    %286 = vector.shape_cast %285 : vector<1x8x1xf32> to vector<8x1xf32>
    %cst_104 = arith.constant 9.99999974E-6 : f32
    %287 = vector.broadcast %cst_104 : f32 to vector<8x1xf32>
    %288 = arith.addf %284, %287 : vector<8x1xf32>
    %289 = math.rsqrt %288 : vector<8x1xf32>
    %290 = arith.mulf %286, %289 : vector<8x1xf32>
    %c1_105 = arith.constant 1 : index
    %c0_106 = arith.constant 0 : index
    %c0_107 = arith.constant 0 : index
    %291 = vector.load %arg4[%c1_105, %c0_106, %c0_107] : memref<2x8x1xf32, #tpu.memory_space<vmem>>, vector<1x8x1xf32>
    %292 = vector.shape_cast %291 : vector<1x8x1xf32> to vector<8x1xf32>
    %293 = arith.mulf %280, %290 : vector<8x1xf32>
    %294 = arith.subf %292, %293 : vector<8x1xf32>
    %295 = vector.broadcast %290 : vector<8x1xf32> to vector<8x256xf32>
    %296 = arith.mulf %231, %295 : vector<8x256xf32>
    %297 = vector.broadcast %294 : vector<8x1xf32> to vector<8x256xf32>
    %298 = arith.addf %296, %297 : vector<8x256xf32>
    %cst_108 = arith.constant 0.000000e+00 : f32
    %299 = vector.broadcast %cst_108 : f32 to vector<8x256xf32>
    %300 = arith.cmpf oge, %298, %299 : vector<8x256xf32>
    %cst_109 = arith.constant 0.00999999977 : f32
    %301 = vector.broadcast %cst_109 : f32 to vector<8x256xf32>
    %302 = arith.mulf %301, %298 : vector<8x256xf32>
    %303 = arith.select %300, %298, %302 : vector<8x256xi1>, vector<8x256xf32>
    %304 = arith.addf %102, %303 : vector<8x256xf32>
    %c1_110 = arith.constant 1 : index
    %c0_111 = arith.constant 0 : index
    %c0_112 = arith.constant 0 : index
    %c0_113 = arith.constant 0 : index
    %305 = vector.load %arg5[%c1_110, %c0_111, %c0_112, %c0_113] : memref<2x4x8x1xf32, #tpu.memory_space<vmem>>, vector<1x1x8x1xf32>
    %306 = vector.shape_cast %305 : vector<1x1x8x1xf32> to vector<8x1xf32>
    %307 = vector.broadcast %306 : vector<8x1xf32> to vector<8x256xf32>
    %308 = arith.mulf %307, %304 : vector<8x256xf32>
    %c1_114 = arith.constant 1 : index
    %c1_115 = arith.constant 1 : index
    %c0_116 = arith.constant 0 : index
    %c0_117 = arith.constant 0 : index
    %309 = vector.load %arg5[%c1_114, %c1_115, %c0_116, %c0_117] : memref<2x4x8x1xf32, #tpu.memory_space<vmem>>, vector<1x1x8x1xf32>
    %310 = vector.shape_cast %309 : vector<1x1x8x1xf32> to vector<8x1xf32>
    %311 = vector.extract_strided_slice %304 {offsets = [6, 0], sizes = [2, 256], strides = [1, 1]} : vector<8x256xf32> to vector<2x256xf32>
    %312 = vector.extract_strided_slice %304 {offsets = [0, 0], sizes = [6, 256], strides = [1, 1]} : vector<8x256xf32> to vector<6x256xf32>
    %313 = tpu.concatenate %311, %312 in 0 : vector<2x256xf32>, vector<6x256xf32> -> vector<8x256xf32>
    %314 = vector.broadcast %310 : vector<8x1xf32> to vector<8x256xf32>
    %315 = arith.mulf %314, %313 : vector<8x256xf32>
    %316 = arith.addf %308, %315 : vector<8x256xf32>
    %c1_118 = arith.constant 1 : index
    %c2_119 = arith.constant 2 : index
    %c0_120 = arith.constant 0 : index
    %c0_121 = arith.constant 0 : index
    %317 = vector.load %arg5[%c1_118, %c2_119, %c0_120, %c0_121] : memref<2x4x8x1xf32, #tpu.memory_space<vmem>>, vector<1x1x8x1xf32>
    %318 = vector.shape_cast %317 : vector<1x1x8x1xf32> to vector<8x1xf32>
    %319 = vector.extract_strided_slice %304 {offsets = [4, 0], sizes = [4, 256], strides = [1, 1]} : vector<8x256xf32> to vector<4x256xf32>
    %320 = vector.extract_strided_slice %304 {offsets = [0, 0], sizes = [4, 256], strides = [1, 1]} : vector<8x256xf32> to vector<4x256xf32>
    %321 = tpu.concatenate %319, %320 in 0 : vector<4x256xf32>, vector<4x256xf32> -> vector<8x256xf32>
    %322 = vector.broadcast %318 : vector<8x1xf32> to vector<8x256xf32>
    %323 = arith.mulf %322, %321 : vector<8x256xf32>
    %324 = arith.addf %316, %323 : vector<8x256xf32>
    %c1_122 = arith.constant 1 : index
    %c3_123 = arith.constant 3 : index
    %c0_124 = arith.constant 0 : index
    %c0_125 = arith.constant 0 : index
    %325 = vector.load %arg5[%c1_122, %c3_123, %c0_124, %c0_125] : memref<2x4x8x1xf32, #tpu.memory_space<vmem>>, vector<1x1x8x1xf32>
    %326 = vector.shape_cast %325 : vector<1x1x8x1xf32> to vector<8x1xf32>
    %327 = vector.extract_strided_slice %304 {offsets = [2, 0], sizes = [6, 256], strides = [1, 1]} : vector<8x256xf32> to vector<6x256xf32>
    %328 = vector.extract_strided_slice %304 {offsets = [0, 0], sizes = [2, 256], strides = [1, 1]} : vector<8x256xf32> to vector<2x256xf32>
    %329 = tpu.concatenate %327, %328 in 0 : vector<6x256xf32>, vector<2x256xf32> -> vector<8x256xf32>
    %330 = vector.broadcast %326 : vector<8x1xf32> to vector<8x256xf32>
    %331 = arith.mulf %330, %329 : vector<8x256xf32>
    %332 = arith.addf %324, %331 : vector<8x256xf32>
    %cst_126 = arith.constant dense<0.000000e+00> : vector<8xf32>
    %333 = vector.multi_reduction <add>, %332, %cst_126 [1] : vector<8x256xf32> to vector<8xf32>
    %334 = vector.shape_cast %333 : vector<8xf32> to vector<8x1xf32>
    %335 = vector.extract_strided_slice %334 {offsets = [0, 0], sizes = [2, 1], strides = [1, 1]} : vector<8x1xf32> to vector<2x1xf32>
    %cst_127 = arith.constant dense<0.000000e+00> : vector<1xf32>
    %336 = vector.multi_reduction <add>, %335, %cst_127 [0] : vector<2x1xf32> to vector<1xf32>
    %337 = vector.shape_cast %336 : vector<1xf32> to vector<1x1xf32>
    %338 = vector.shape_cast %337 : vector<1x1xf32> to vector<1x1xf32>
    %339 = vector.broadcast %338 : vector<1x1xf32> to vector<2x1xf32>
    %340 = vector.extract_strided_slice %334 {offsets = [2, 0], sizes = [2, 1], strides = [1, 1]} : vector<8x1xf32> to vector<2x1xf32>
    %cst_128 = arith.constant dense<0.000000e+00> : vector<1xf32>
    %341 = vector.multi_reduction <add>, %340, %cst_128 [0] : vector<2x1xf32> to vector<1xf32>
    %342 = vector.shape_cast %341 : vector<1xf32> to vector<1x1xf32>
    %343 = vector.shape_cast %342 : vector<1x1xf32> to vector<1x1xf32>
    %344 = vector.broadcast %343 : vector<1x1xf32> to vector<2x1xf32>
    %345 = vector.extract_strided_slice %334 {offsets = [4, 0], sizes = [2, 1], strides = [1, 1]} : vector<8x1xf32> to vector<2x1xf32>
    %cst_129 = arith.constant dense<0.000000e+00> : vector<1xf32>
    %346 = vector.multi_reduction <add>, %345, %cst_129 [0] : vector<2x1xf32> to vector<1xf32>
    %347 = vector.shape_cast %346 : vector<1xf32> to vector<1x1xf32>
    %348 = vector.shape_cast %347 : vector<1x1xf32> to vector<1x1xf32>
    %349 = vector.broadcast %348 : vector<1x1xf32> to vector<2x1xf32>
    %350 = vector.extract_strided_slice %334 {offsets = [6, 0], sizes = [2, 1], strides = [1, 1]} : vector<8x1xf32> to vector<2x1xf32>
    %cst_130 = arith.constant dense<0.000000e+00> : vector<1xf32>
    %351 = vector.multi_reduction <add>, %350, %cst_130 [0] : vector<2x1xf32> to vector<1xf32>
    %352 = vector.shape_cast %351 : vector<1xf32> to vector<1x1xf32>
    %353 = vector.shape_cast %352 : vector<1x1xf32> to vector<1x1xf32>
    %354 = vector.broadcast %353 : vector<1x1xf32> to vector<2x1xf32>
    %355 = tpu.concatenate %339, %344, %349, %354 in 0 : vector<2x1xf32>, vector<2x1xf32>, vector<2x1xf32>, vector<2x1xf32> -> vector<8x1xf32>
    %356 = arith.mulf %332, %332 : vector<8x256xf32>
    %cst_131 = arith.constant dense<0.000000e+00> : vector<8xf32>
    %357 = vector.multi_reduction <add>, %356, %cst_131 [1] : vector<8x256xf32> to vector<8xf32>
    %358 = vector.shape_cast %357 : vector<8xf32> to vector<8x1xf32>
    %359 = vector.extract_strided_slice %358 {offsets = [0, 0], sizes = [2, 1], strides = [1, 1]} : vector<8x1xf32> to vector<2x1xf32>
    %cst_132 = arith.constant dense<0.000000e+00> : vector<1xf32>
    %360 = vector.multi_reduction <add>, %359, %cst_132 [0] : vector<2x1xf32> to vector<1xf32>
    %361 = vector.shape_cast %360 : vector<1xf32> to vector<1x1xf32>
    %362 = vector.shape_cast %361 : vector<1x1xf32> to vector<1x1xf32>
    %363 = vector.broadcast %362 : vector<1x1xf32> to vector<2x1xf32>
    %364 = vector.extract_strided_slice %358 {offsets = [2, 0], sizes = [2, 1], strides = [1, 1]} : vector<8x1xf32> to vector<2x1xf32>
    %cst_133 = arith.constant dense<0.000000e+00> : vector<1xf32>
    %365 = vector.multi_reduction <add>, %364, %cst_133 [0] : vector<2x1xf32> to vector<1xf32>
    %366 = vector.shape_cast %365 : vector<1xf32> to vector<1x1xf32>
    %367 = vector.shape_cast %366 : vector<1x1xf32> to vector<1x1xf32>
    %368 = vector.broadcast %367 : vector<1x1xf32> to vector<2x1xf32>
    %369 = vector.extract_strided_slice %358 {offsets = [4, 0], sizes = [2, 1], strides = [1, 1]} : vector<8x1xf32> to vector<2x1xf32>
    %cst_134 = arith.constant dense<0.000000e+00> : vector<1xf32>
    %370 = vector.multi_reduction <add>, %369, %cst_134 [0] : vector<2x1xf32> to vector<1xf32>
    %371 = vector.shape_cast %370 : vector<1xf32> to vector<1x1xf32>
    %372 = vector.shape_cast %371 : vector<1x1xf32> to vector<1x1xf32>
    %373 = vector.broadcast %372 : vector<1x1xf32> to vector<2x1xf32>
    %374 = vector.extract_strided_slice %358 {offsets = [6, 0], sizes = [2, 1], strides = [1, 1]} : vector<8x1xf32> to vector<2x1xf32>
    %cst_135 = arith.constant dense<0.000000e+00> : vector<1xf32>
    %375 = vector.multi_reduction <add>, %374, %cst_135 [0] : vector<2x1xf32> to vector<1xf32>
    %376 = vector.shape_cast %375 : vector<1xf32> to vector<1x1xf32>
    %377 = vector.shape_cast %376 : vector<1x1xf32> to vector<1x1xf32>
    %378 = vector.broadcast %377 : vector<1x1xf32> to vector<2x1xf32>
    %379 = tpu.concatenate %363, %368, %373, %378 in 0 : vector<2x1xf32>, vector<2x1xf32>, vector<2x1xf32>, vector<2x1xf32> -> vector<8x1xf32>
    %cst_136 = arith.constant 0.001953125 : f32
    %380 = vector.broadcast %cst_136 : f32 to vector<8x1xf32>
    %381 = arith.mulf %355, %380 : vector<8x1xf32>
    %cst_137 = arith.constant 0.001953125 : f32
    %382 = vector.broadcast %cst_137 : f32 to vector<8x1xf32>
    %383 = arith.mulf %379, %382 : vector<8x1xf32>
    %384 = arith.mulf %381, %381 : vector<8x1xf32>
    %385 = arith.subf %383, %384 : vector<8x1xf32>
    %c1_138 = arith.constant 1 : index
    %c0_139 = arith.constant 0 : index
    %c0_140 = arith.constant 0 : index
    %386 = vector.load %arg6[%c1_138, %c0_139, %c0_140] : memref<2x8x1xf32, #tpu.memory_space<vmem>>, vector<1x8x1xf32>
    %387 = vector.shape_cast %386 : vector<1x8x1xf32> to vector<8x1xf32>
    %cst_141 = arith.constant 9.99999974E-6 : f32
    %388 = vector.broadcast %cst_141 : f32 to vector<8x1xf32>
    %389 = arith.addf %385, %388 : vector<8x1xf32>
    %390 = math.rsqrt %389 : vector<8x1xf32>
    %391 = arith.mulf %387, %390 : vector<8x1xf32>
    %c1_142 = arith.constant 1 : index
    %c0_143 = arith.constant 0 : index
    %c0_144 = arith.constant 0 : index
    %392 = vector.load %arg7[%c1_142, %c0_143, %c0_144] : memref<2x8x1xf32, #tpu.memory_space<vmem>>, vector<1x8x1xf32>
    %393 = vector.shape_cast %392 : vector<1x8x1xf32> to vector<8x1xf32>
    %394 = arith.mulf %381, %391 : vector<8x1xf32>
    %395 = arith.subf %393, %394 : vector<8x1xf32>
    %396 = vector.broadcast %391 : vector<8x1xf32> to vector<8x256xf32>
    %397 = arith.mulf %332, %396 : vector<8x256xf32>
    %398 = vector.broadcast %395 : vector<8x1xf32> to vector<8x256xf32>
    %399 = arith.addf %397, %398 : vector<8x256xf32>
    %cst_145 = arith.constant 0.000000e+00 : f32
    %400 = vector.broadcast %cst_145 : f32 to vector<8x256xf32>
    %401 = arith.cmpf oge, %399, %400 : vector<8x256xf32>
    %cst_146 = arith.constant 0.00999999977 : f32
    %402 = vector.broadcast %cst_146 : f32 to vector<8x256xf32>
    %403 = arith.mulf %402, %399 : vector<8x256xf32>
    %404 = arith.select %401, %399, %403 : vector<8x256xi1>, vector<8x256xf32>
    %405 = arith.addf %203, %404 : vector<8x256xf32>
    %c0_147 = arith.constant 0 : index
    %c0_148 = arith.constant 0 : index
    %406 = vector.load %arg8[%c0_147, %c0_148] : memref<8x256xf32, #tpu.memory_space<vmem>>, vector<8x256xf32>
    tpu.vector_store %arg8[%c0_147, %c0_148], %304 {strides = array<i32>} : memref<8x256xf32, #tpu.memory_space<vmem>>, vector<8x256xf32>,
    %c0_149 = arith.constant 0 : index
    %c0_150 = arith.constant 0 : index
    %407 = vector.load %arg9[%c0_149, %c0_150] : memref<8x256xf32, #tpu.memory_space<vmem>>, vector<8x256xf32>
    tpu.vector_store %arg9[%c0_149, %c0_150], %405 {strides = array<i32>} : memref<8x256xf32, #tpu.memory_space<vmem>>, vector<8x256xf32>,
    return
  }
}

</mosaic_0001>

<llo_original>
// kernel: tpu_custom_call.1
$region0: #{tpu_custom_call.1}
  #allocation0 [shape = 'u32[]', space=smem, size = 0x4, offset = 0x4, fixed_abs, tag = 'smem constant byte address 0x4 - core index']
  #allocation1 [shape = 'u32[144,128]{1,0:T(1,128)}', space=vmem, size = 0x12000, scoped, tag = 'internal scratch']
  %s0 = inlined_call_operand.vmem [shape: f32[8,256], index: 0, kind: input, shape index: {}]
  %s1 = inlined_call_operand.vmem [shape: f32[8,256], index: 1, kind: input, shape index: {}]
  %s2 = inlined_call_operand.vmem [shape: f32[2,4,8,1], index: 2, kind: input, shape index: {}]
  %s3 = inlined_call_operand.vmem [shape: f32[2,8,1], index: 3, kind: input, shape index: {}]
  %s4 = inlined_call_operand.vmem [shape: f32[2,8,1], index: 4, kind: input, shape index: {}]
  %s5 = inlined_call_operand.vmem [shape: f32[2,4,8,1], index: 5, kind: input, shape index: {}]
  %s6 = inlined_call_operand.vmem [shape: f32[2,8,1], index: 6, kind: input, shape index: {}]
  %s7 = inlined_call_operand.vmem [shape: f32[2,8,1], index: 7, kind: input, shape index: {}]
  %s8 = inlined_call_operand.hbm [shape: f32[8,256], index: 8, kind: output, shape index: {0}]
  %s9 = inlined_call_operand.hbm [shape: f32[8,256], index: 9, kind: output, shape index: {1}]
  %10 = xla_tuple %s8, %s9
  %s11 = sld [smem:[#allocation0]]
  $region50: #{tpu_custom_call.1} parent=0
    _
  %s13 = ssub.s32 1, %s11
  %s14 = scalar_select 0, %s13, %s11
  $region1: #{tpu_custom_call.1} parent=0
    #allocation2 [shape = 'u8[8192]{0}', space=vmem, size = 0x2000, scoped, tag = 'output window, operand 0, single buffered']
    #allocation3 [shape = 's32[1]{0}', space=sflag, size = 0x4, scoped, tag = 'scoped memory for tpu_custom_call.1']
    #allocation4 [shape = 'u8[8192]{0}', space=vmem, size = 0x2000, scoped, tag = 'output window, operand 1, single buffered']
    #allocation5 [shape = 's32[1]{0}', space=sflag, size = 0x4, scoped, tag = 'scoped memory for tpu_custom_call.1']
    %15 = vsyncpa [#allocation3], 0
    %16 = vsyncpa [#allocation5], 0
    // Predicated region
    $region2: #{tpu_custom_call.1} parent=1 // pred_check
      _
    $region3: #{tpu_custom_call.1} parent=1 // pred_check_branch
      %18 = sbr.rel (0) target = $region5
    $region4: #{tpu_custom_call.1} parent=1 // pred_region
      _
    $region5: #{tpu_custom_call.1} parent=1 // pred_fallthru
      _
    // Predicated region
    $region6: #{tpu_custom_call.1} parent=1 // pred_check
      _
    $region7: #{tpu_custom_call.1} parent=1 // pred_check_branch
      %20 = sbr.rel (0) target = $region9
    $region8: #{tpu_custom_call.1} parent=1 // pred_region
      _
    $region9: #{tpu_custom_call.1} parent=1 // pred_fallthru
      _
    // Predicated region
    $region10: #{tpu_custom_call.1} parent=1 // pred_check
      _
    $region11: #{tpu_custom_call.1} parent=1 // pred_check_branch
      %22 = sbr.rel (0) target = $region13
    $region12: #{tpu_custom_call.1} parent=1 // pred_region
      _
    $region13: #{tpu_custom_call.1} parent=1 // pred_fallthru
      _
    // Predicated region
    $region14: #{tpu_custom_call.1} parent=1 // pred_check
      _
    $region15: #{tpu_custom_call.1} parent=1 // pred_check_branch
      %24 = sbr.rel (0) target = $region17
    $region16: #{tpu_custom_call.1} parent=1 // pred_region
      _
    $region17: #{tpu_custom_call.1} parent=1 // pred_fallthru
      _
    // Predicated region
    $region18: #{tpu_custom_call.1} parent=1 // pred_check
      _
    $region19: #{tpu_custom_call.1} parent=1 // pred_check_branch
      %26 = sbr.rel (0) target = $region21
    $region20: #{tpu_custom_call.1} parent=1 // pred_region
      _
    $region21: #{tpu_custom_call.1} parent=1 // pred_fallthru
      _
    // Predicated region
    $region22: #{tpu_custom_call.1} parent=1 // pred_check
      _
    $region23: #{tpu_custom_call.1} parent=1 // pred_check_branch
      %28 = sbr.rel (0) target = $region25
    $region24: #{tpu_custom_call.1} parent=1 // pred_region
      _
    $region25: #{tpu_custom_call.1} parent=1 // pred_fallthru
      _
    // Predicated region
    $region26: #{tpu_custom_call.1} parent=1 // pred_check
      _
    $region27: #{tpu_custom_call.1} parent=1 // pred_check_branch
      %30 = sbr.rel (0) target = $region29
    $region28: #{tpu_custom_call.1} parent=1 // pred_region
      _
    $region29: #{tpu_custom_call.1} parent=1 // pred_fallthru
      _
    // Predicated region
    $region30: #{tpu_custom_call.1} parent=1 // pred_check
      _
    $region31: #{tpu_custom_call.1} parent=1 // pred_check_branch
      %32 = sbr.rel (0) target = $region33
    $region32: #{tpu_custom_call.1} parent=1 // pred_region
      _
    $region33: #{tpu_custom_call.1} parent=1 // pred_fallthru
      _
    %v33 = vld [vmem:[%s0] sm:$0xff]
    %v34 = vld [vmem:[%s0 + $0x8] sm:$0xff]
    %v35 = vld [vmem:[%s1] sm:$0xff]
    %v36 = vld [vmem:[%s1 + $0x8] sm:$0xff]
    %v37 = vld [vmem:[%s2] sm:$0xff]
    %39 = vset.pattern.permute.xlu0 0
    %40 = vperm.xlu0 %39, %v37
    %v41 = vpop.permute.xlu0 %40
    %v43 = vmul.f32 %v41, %v35
    %v44 = vmul.f32 %v41, %v36
    %s45 = scalar_lea.vmem %s2, 8
    %v46 = vld [vmem:[%s45] sm:$0xff]
    %v49 = vrot.slane %v35, 6
    %v50 = vrot.slane %v36, 6
    %vm53 = vcmask 1041408
    %v54 = vsel %vm53, %v49, %v49
    %v55 = vsel %vm53, %v50, %v50
    %57 = vset.pattern.permute.xlu0 0
    %58 = vperm.xlu0 %57, %v46
    %v59 = vpop.permute.xlu0 %58
    %v61 = vmul.f32 %v59, %v54
    %v62 = vmul.f32 %v59, %v55
    %v63 = vadd.f32 %v43, %v61
    %v64 = vadd.f32 %v44, %v62
    %s65 = scalar_lea.vmem %s2, 16
    %v66 = vld [vmem:[%s65] sm:$0xff]
    %v67 = vrot.slane %v35, 4
    %v68 = vrot.slane %v36, 4
    %vm71 = vcmask 1043456
    %v72 = vsel %vm71, %v67, %v67
    %v73 = vsel %vm71, %v68, %v68
    %75 = vset.pattern.permute.xlu0 0
    %76 = vperm.xlu0 %75, %v66
    %v77 = vpop.permute.xlu0 %76
    %v79 = vmul.f32 %v77, %v72
    %v80 = vmul.f32 %v77, %v73
    %v81 = vadd.f32 %v63, %v79
    %v82 = vadd.f32 %v64, %v80
    %s83 = scalar_lea.vmem %s2, 24
    %v84 = vld [vmem:[%s83] sm:$0xff]
    %v85 = vrot.slane %v35, 2
    %v86 = vrot.slane %v36, 2
    %vm89 = vcmask 1045504
    %v90 = vsel %vm89, %v85, %v85
    %v91 = vsel %vm89, %v86, %v86
    %93 = vset.pattern.permute.xlu0 0
    %94 = vperm.xlu0 %93, %v84
    %v95 = vpop.permute.xlu0 %94
    %v97 = vmul.f32 %v95, %v90
    %v98 = vmul.f32 %v95, %v91
    %v99 = vadd.f32 %v81, %v97
    %v100 = vadd.f32 %v82, %v98
    %v101 = vadd.f32 %v99, %v100
    %102 = vadd.xlane.f32.xlu0 %v101
    %v103 = vpop.xlane.xlu0 %102
    %v104 = vsel %vm53, %v103, 0.0
    %v105 = vrot.slane %v104, 4
    %v106 = vadd.f32 %v104, %v105
    %v107 = vrot.slane %v106, 2
    %v108 = vadd.f32 %v106, %v107
    %v109 = vrot.slane %v108, 1
    %v110 = vadd.f32 %v108, %v109
    %v112 = vrot.slane %v103, 2
    %v114 = vsel %vm53, %v112, 0.0
    %v115 = vrot.slane %v114, 4
    %v116 = vadd.f32 %v114, %v115
    %v117 = vrot.slane %v116, 2
    %v118 = vadd.f32 %v116, %v117
    %v119 = vrot.slane %v118, 1
    %v120 = vadd.f32 %v118, %v119
    %v121 = vrot.slane %v103, 4
    %v123 = vsel %vm53, %v121, 0.0
    %v124 = vrot.slane %v123, 4
    %v125 = vadd.f32 %v123, %v124
    %v126 = vrot.slane %v125, 2
    %v127 = vadd.f32 %v125, %v126
    %v128 = vrot.slane %v127, 1
    %v129 = vadd.f32 %v127, %v128
    %v130 = vrot.slane %v103, 6
    %v132 = vsel %vm53, %v130, 0.0
    %v133 = vrot.slane %v132, 4
    %v134 = vadd.f32 %v132, %v133
    %v135 = vrot.slane %v134, 2
    %v136 = vadd.f32 %v134, %v135
    %v137 = vrot.slane %v136, 1
    %v138 = vadd.f32 %v136, %v137
    %v139 = vsel %vm53, %v110, %v120
    %v140 = vsel %vm71, %v139, %v129
    %v141 = vsel %vm89, %v140, %v138
    %v142 = vmul.f32 %v99, %v99
    %v143 = vmul.f32 %v100, %v100
    %v144 = vadd.f32 %v142, %v143
    %145 = vadd.xlane.f32.xlu0 %v144
    %v146 = vpop.xlane.xlu0 %145
    %v147 = vsel %vm53, %v146, 0.0
    %v148 = vrot.slane %v147, 4
    %v149 = vadd.f32 %v147, %v148
    %v150 = vrot.slane %v149, 2
    %v151 = vadd.f32 %v149, %v150
    %v152 = vrot.slane %v151, 1
    %v153 = vadd.f32 %v151, %v152
    %v155 = vrot.slane %v146, 2
    %v157 = vsel %vm53, %v155, 0.0
    %v158 = vrot.slane %v157, 4
    %v159 = vadd.f32 %v157, %v158
    %v160 = vrot.slane %v159, 2
    %v161 = vadd.f32 %v159, %v160
    %v162 = vrot.slane %v161, 1
    %v163 = vadd.f32 %v161, %v162
    %v164 = vrot.slane %v146, 4
    %v166 = vsel %vm53, %v164, 0.0
    %v167 = vrot.slane %v166, 4
    %v168 = vadd.f32 %v166, %v167
    %v169 = vrot.slane %v168, 2
    %v170 = vadd.f32 %v168, %v169
    %v171 = vrot.slane %v170, 1
    %v172 = vadd.f32 %v170, %v171
    %v173 = vrot.slane %v146, 6
    %v175 = vsel %vm53, %v173, 0.0
    %v176 = vrot.slane %v175, 4
    %v177 = vadd.f32 %v175, %v176
    %v178 = vrot.slane %v177, 2
    %v179 = vadd.f32 %v177, %v178
    %v180 = vrot.slane %v179, 1
    %v181 = vadd.f32 %v179, %v180
    %v182 = vsel %vm53, %v153, %v163
    %v183 = vsel %vm71, %v182, %v172
    %v184 = vsel %vm89, %v183, %v181
    %v185 = vmul.f32 %v141, 0.001953125
    %v186 = vmul.f32 %v184, 0.001953125
    %v187 = vmul.f32 %v185, %v185
    %v188 = vsub.f32 %v186, %v187
    %v189 = vld [vmem:[%s3] sm:$0xff]
    %v190 = vadd.f32 %v188, 1e-05
    %v191 = vrsqrt.pop %v190
    %v192 = vmul.f32 %v189, %v191
    %v193 = vld [vmem:[%s4] sm:$0xff]
    %v194 = vmul.f32 %v185, %v192
    %v195 = vsub.f32 %v193, %v194
    %197 = vset.pattern.permute.xlu0 0
    %198 = vperm.xlu0 %197, %v192
    %v199 = vpop.permute.xlu0 %198
    %v201 = vmul.f32 %v99, %v199
    %v202 = vmul.f32 %v100, %v199
    %204 = vset.pattern.permute.xlu0 0
    %205 = vperm.xlu0 %204, %v195
    %v206 = vpop.permute.xlu0 %205
    %v208 = vadd.f32 %v201, %v206
    %v209 = vadd.f32 %v202, %v206
    %vm210 = vcmp.ge.f32.partialorder %v208, 0.0
    %vm211 = vcmp.ge.f32.partialorder %v209, 0.0
    %v212 = vmul.f32 %v208, 0.01
    %v213 = vmul.f32 %v209, 0.01
    %v214 = vsel %vm210, %v208, %v212
    %v215 = vsel %vm211, %v209, %v213
    %v216 = vadd.f32 %v33, %v214
    %v217 = vadd.f32 %v34, %v215
    %v218 = vld [vmem:[%s5] sm:$0xff]
    %220 = vset.pattern.permute.xlu0 0
    %221 = vperm.xlu0 %220, %v218
    %v222 = vpop.permute.xlu0 %221
    %v224 = vmul.f32 %v222, %v216
    %v225 = vmul.f32 %v222, %v217
    %s226 = scalar_lea.vmem %s5, 8
    %v227 = vld [vmem:[%s226] sm:$0xff]
    %v230 = vrot.slane %v216, 6
    %v231 = vrot.slane %v217, 6
    %v234 = vsel %vm53, %v230, %v230
    %v235 = vsel %vm53, %v231, %v231
    %237 = vset.pattern.permute.xlu0 0
    %238 = vperm.xlu0 %237, %v227
    %v239 = vpop.permute.xlu0 %238
    %v241 = vmul.f32 %v239, %v234
    %v242 = vmul.f32 %v239, %v235
    %v243 = vadd.f32 %v224, %v241
    %v244 = vadd.f32 %v225, %v242
    %s245 = scalar_lea.vmem %s5, 16
    %v246 = vld [vmem:[%s245] sm:$0xff]
    %v247 = vrot.slane %v216, 4
    %v248 = vrot.slane %v217, 4
    %v251 = vsel %vm71, %v247, %v247
    %v252 = vsel %vm71, %v248, %v248
    %254 = vset.pattern.permute.xlu0 0
    %255 = vperm.xlu0 %254, %v246
    %v256 = vpop.permute.xlu0 %255
    %v258 = vmul.f32 %v256, %v251
    %v259 = vmul.f32 %v256, %v252
    %v260 = vadd.f32 %v243, %v258
    %v261 = vadd.f32 %v244, %v259
    %s262 = scalar_lea.vmem %s5, 24
    %v263 = vld [vmem:[%s262] sm:$0xff]
    %v264 = vrot.slane %v216, 2
    %v265 = vrot.slane %v217, 2
    %v268 = vsel %vm89, %v264, %v264
    %v269 = vsel %vm89, %v265, %v265
    %271 = vset.pattern.permute.xlu0 0
    %272 = vperm.xlu0 %271, %v263
    %v273 = vpop.permute.xlu0 %272
    %v275 = vmul.f32 %v273, %v268
    %v276 = vmul.f32 %v273, %v269
    %v277 = vadd.f32 %v260, %v275
    %v278 = vadd.f32 %v261, %v276
    %v279 = vadd.f32 %v277, %v278
    %280 = vadd.xlane.f32.xlu0 %v279
    %v281 = vpop.xlane.xlu0 %280
    %v282 = vsel %vm53, %v281, 0.0
    %v283 = vrot.slane %v282, 4
    %v284 = vadd.f32 %v282, %v283
    %v285 = vrot.slane %v284, 2
    %v286 = vadd.f32 %v284, %v285
    %v287 = vrot.slane %v286, 1
    %v288 = vadd.f32 %v286, %v287
    %v290 = vrot.slane %v281, 2
    %v292 = vsel %vm53, %v290, 0.0
    %v293 = vrot.slane %v292, 4
    %v294 = vadd.f32 %v292, %v293
    %v295 = vrot.slane %v294, 2
    %v296 = vadd.f32 %v294, %v295
    %v297 = vrot.slane %v296, 1
    %v298 = vadd.f32 %v296, %v297
    %v299 = vrot.slane %v281, 4
    %v301 = vsel %vm53, %v299, 0.0
    %v302 = vrot.slane %v301, 4
    %v303 = vadd.f32 %v301, %v302
    %v304 = vrot.slane %v303, 2
    %v305 = vadd.f32 %v303, %v304
    %v306 = vrot.slane %v305, 1
    %v307 = vadd.f32 %v305, %v306
    %v308 = vrot.slane %v281, 6
    %v310 = vsel %vm53, %v308, 0.0
    %v311 = vrot.slane %v310, 4
    %v312 = vadd.f32 %v310, %v311
    %v313 = vrot.slane %v312, 2
    %v314 = vadd.f32 %v312, %v313
    %v315 = vrot.slane %v314, 1
    %v316 = vadd.f32 %v314, %v315
    %v317 = vsel %vm53, %v288, %v298
    %v318 = vsel %vm71, %v317, %v307
    %v319 = vsel %vm89, %v318, %v316
    %v320 = vmul.f32 %v277, %v277
    %v321 = vmul.f32 %v278, %v278
    %v322 = vadd.f32 %v320, %v321
    %323 = vadd.xlane.f32.xlu0 %v322
    %v324 = vpop.xlane.xlu0 %323
    %v325 = vsel %vm53, %v324, 0.0
    %v326 = vrot.slane %v325, 4
    %v327 = vadd.f32 %v325, %v326
    %v328 = vrot.slane %v327, 2
    %v329 = vadd.f32 %v327, %v328
    %v330 = vrot.slane %v329, 1
    %v331 = vadd.f32 %v329, %v330
    %v333 = vrot.slane %v324, 2
    %v335 = vsel %vm53, %v333, 0.0
    %v336 = vrot.slane %v335, 4
    %v337 = vadd.f32 %v335, %v336
    %v338 = vrot.slane %v337, 2
    %v339 = vadd.f32 %v337, %v338
    %v340 = vrot.slane %v339, 1
    %v341 = vadd.f32 %v339, %v340
    %v342 = vrot.slane %v324, 4
    %v344 = vsel %vm53, %v342, 0.0
    %v345 = vrot.slane %v344, 4
    %v346 = vadd.f32 %v344, %v345
    %v347 = vrot.slane %v346, 2
    %v348 = vadd.f32 %v346, %v347
    %v349 = vrot.slane %v348, 1
    %v350 = vadd.f32 %v348, %v349
    %v351 = vrot.slane %v324, 6
    %v353 = vsel %vm53, %v351, 0.0
    %v354 = vrot.slane %v353, 4
    %v355 = vadd.f32 %v353, %v354
    %v356 = vrot.slane %v355, 2
    %v357 = vadd.f32 %v355, %v356
    %v358 = vrot.slane %v357, 1
    %v359 = vadd.f32 %v357, %v358
    %v360 = vsel %vm53, %v331, %v341
    %v361 = vsel %vm71, %v360, %v350
    %v362 = vsel %vm89, %v361, %v359
    %v363 = vmul.f32 %v319, 0.001953125
    %v364 = vmul.f32 %v362, 0.001953125
    %v365 = vmul.f32 %v363, %v363
    %v366 = vsub.f32 %v364, %v365
    %v367 = vld [vmem:[%s6] sm:$0xff]
    %v368 = vadd.f32 %v366, 1e-05
    %v369 = vrsqrt.pop %v368
    %v370 = vmul.f32 %v367, %v369
    %v371 = vld [vmem:[%s7] sm:$0xff]
    %v372 = vmul.f32 %v363, %v370
    %v373 = vsub.f32 %v371, %v372
    %375 = vset.pattern.permute.xlu0 0
    %376 = vperm.xlu0 %375, %v370
    %v377 = vpop.permute.xlu0 %376
    %v379 = vmul.f32 %v277, %v377
    %v380 = vmul.f32 %v278, %v377
    %382 = vset.pattern.permute.xlu0 0
    %383 = vperm.xlu0 %382, %v373
    %v384 = vpop.permute.xlu0 %383
    %v386 = vadd.f32 %v379, %v384
    %v387 = vadd.f32 %v380, %v384
    %vm388 = vcmp.ge.f32.partialorder %v386, 0.0
    %vm389 = vcmp.ge.f32.partialorder %v387, 0.0
    %v390 = vmul.f32 %v386, 0.01
    %v391 = vmul.f32 %v387, 0.01
    %v392 = vsel %vm388, %v386, %v390
    %v393 = vsel %vm389, %v387, %v391
    %v394 = vadd.f32 %v35, %v392
    %v395 = vadd.f32 %v36, %v393
    %s396 = scalar_lea.vmem %s2, 32
    %v397 = vld [vmem:[%s396] sm:$0xff]
    %399 = vset.pattern.permute.xlu0 0
    %400 = vperm.xlu0 %399, %v397
    %v401 = vpop.permute.xlu0 %400
    %v403 = vmul.f32 %v401, %v394
    %v404 = vmul.f32 %v401, %v395
    %s405 = scalar_lea.vmem %s2, 40
    %v406 = vld [vmem:[%s405] sm:$0xff]
    %v409 = vrot.slane %v394, 6
    %v410 = vrot.slane %v395, 6
    %v413 = vsel %vm53, %v409, %v409
    %v414 = vsel %vm53, %v410, %v410
    %416 = vset.pattern.permute.xlu0 0
    %417 = vperm.xlu0 %416, %v406
    %v418 = vpop.permute.xlu0 %417
    %v420 = vmul.f32 %v418, %v413
    %v421 = vmul.f32 %v418, %v414
    %v422 = vadd.f32 %v403, %v420
    %v423 = vadd.f32 %v404, %v421
    %s424 = scalar_lea.vmem %s2, 48
    %v425 = vld [vmem:[%s424] sm:$0xff]
    %v426 = vrot.slane %v394, 4
    %v427 = vrot.slane %v395, 4
    %v430 = vsel %vm71, %v426, %v426
    %v431 = vsel %vm71, %v427, %v427
    %433 = vset.pattern.permute.xlu0 0
    %434 = vperm.xlu0 %433, %v425
    %v435 = vpop.permute.xlu0 %434
    %v437 = vmul.f32 %v435, %v430
    %v438 = vmul.f32 %v435, %v431
    %v439 = vadd.f32 %v422, %v437
    %v440 = vadd.f32 %v423, %v438
    %s441 = scalar_lea.vmem %s2, 56
    %v442 = vld [vmem:[%s441] sm:$0xff]
    %v443 = vrot.slane %v394, 2
    %v444 = vrot.slane %v395, 2
    %v447 = vsel %vm89, %v443, %v443
    %v448 = vsel %vm89, %v444, %v444
    %450 = vset.pattern.permute.xlu0 0
    %451 = vperm.xlu0 %450, %v442
    %v452 = vpop.permute.xlu0 %451
    %v454 = vmul.f32 %v452, %v447
    %v455 = vmul.f32 %v452, %v448
    %v456 = vadd.f32 %v439, %v454
    %v457 = vadd.f32 %v440, %v455
    %v458 = vadd.f32 %v456, %v457
    %459 = vadd.xlane.f32.xlu0 %v458
    %v460 = vpop.xlane.xlu0 %459
    %v461 = vsel %vm53, %v460, 0.0
    %v462 = vrot.slane %v461, 4
    %v463 = vadd.f32 %v461, %v462
    %v464 = vrot.slane %v463, 2
    %v465 = vadd.f32 %v463, %v464
    %v466 = vrot.slane %v465, 1
    %v467 = vadd.f32 %v465, %v466
    %v469 = vrot.slane %v460, 2
    %v471 = vsel %vm53, %v469, 0.0
    %v472 = vrot.slane %v471, 4
    %v473 = vadd.f32 %v471, %v472
    %v474 = vrot.slane %v473, 2
    %v475 = vadd.f32 %v473, %v474
    %v476 = vrot.slane %v475, 1
    %v477 = vadd.f32 %v475, %v476
    %v478 = vrot.slane %v460, 4
    %v480 = vsel %vm53, %v478, 0.0
    %v481 = vrot.slane %v480, 4
    %v482 = vadd.f32 %v480, %v481
    %v483 = vrot.slane %v482, 2
    %v484 = vadd.f32 %v482, %v483
    %v485 = vrot.slane %v484, 1
    %v486 = vadd.f32 %v484, %v485
    %v487 = vrot.slane %v460, 6
    %v489 = vsel %vm53, %v487, 0.0
    %v490 = vrot.slane %v489, 4
    %v491 = vadd.f32 %v489, %v490
    %v492 = vrot.slane %v491, 2
    %v493 = vadd.f32 %v491, %v492
    %v494 = vrot.slane %v493, 1
    %v495 = vadd.f32 %v493, %v494
    %v496 = vsel %vm53, %v467, %v477
    %v497 = vsel %vm71, %v496, %v486
    %v498 = vsel %vm89, %v497, %v495
    %v499 = vmul.f32 %v456, %v456
    %v500 = vmul.f32 %v457, %v457
    %v501 = vadd.f32 %v499, %v500
    %502 = vadd.xlane.f32.xlu0 %v501
    %v503 = vpop.xlane.xlu0 %502
    %v504 = vsel %vm53, %v503, 0.0
    %v505 = vrot.slane %v504, 4
    %v506 = vadd.f32 %v504, %v505
    %v507 = vrot.slane %v506, 2
    %v508 = vadd.f32 %v506, %v507
    %v509 = vrot.slane %v508, 1
    %v510 = vadd.f32 %v508, %v509
    %v512 = vrot.slane %v503, 2
    %v514 = vsel %vm53, %v512, 0.0
    %v515 = vrot.slane %v514, 4
    %v516 = vadd.f32 %v514, %v515
    %v517 = vrot.slane %v516, 2
    %v518 = vadd.f32 %v516, %v517
    %v519 = vrot.slane %v518, 1
    %v520 = vadd.f32 %v518, %v519
    %v521 = vrot.slane %v503, 4
    %v523 = vsel %vm53, %v521, 0.0
    %v524 = vrot.slane %v523, 4
    %v525 = vadd.f32 %v523, %v524
    %v526 = vrot.slane %v525, 2
    %v527 = vadd.f32 %v525, %v526
    %v528 = vrot.slane %v527, 1
    %v529 = vadd.f32 %v527, %v528
    %v530 = vrot.slane %v503, 6
    %v532 = vsel %vm53, %v530, 0.0
    %v533 = vrot.slane %v532, 4
    %v534 = vadd.f32 %v532, %v533
    %v535 = vrot.slane %v534, 2
    %v536 = vadd.f32 %v534, %v535
    %v537 = vrot.slane %v536, 1
    %v538 = vadd.f32 %v536, %v537
    %v539 = vsel %vm53, %v510, %v520
    %v540 = vsel %vm71, %v539, %v529
    %v541 = vsel %vm89, %v540, %v538
    %v542 = vmul.f32 %v498, 0.001953125
    %v543 = vmul.f32 %v541, 0.001953125
    %v544 = vmul.f32 %v542, %v542
    %v545 = vsub.f32 %v543, %v544
    %s546 = scalar_lea.vmem %s3, 8
    %v547 = vld [vmem:[%s546] sm:$0xff]
    %v548 = vadd.f32 %v545, 1e-05
    %v549 = vrsqrt.pop %v548
    %v550 = vmul.f32 %v547, %v549
    %s551 = scalar_lea.vmem %s4, 8
    %v552 = vld [vmem:[%s551] sm:$0xff]
    %v553 = vmul.f32 %v542, %v550
    %v554 = vsub.f32 %v552, %v553
    %556 = vset.pattern.permute.xlu0 0
    %557 = vperm.xlu0 %556, %v550
    %v558 = vpop.permute.xlu0 %557
    %v560 = vmul.f32 %v456, %v558
    %v561 = vmul.f32 %v457, %v558
    %563 = vset.pattern.permute.xlu0 0
    %564 = vperm.xlu0 %563, %v554
    %v565 = vpop.permute.xlu0 %564
    %v567 = vadd.f32 %v560, %v565
    %v568 = vadd.f32 %v561, %v565
    %vm569 = vcmp.ge.f32.partialorder %v567, 0.0
    %vm570 = vcmp.ge.f32.partialorder %v568, 0.0
    %v571 = vmul.f32 %v567, 0.01
    %v572 = vmul.f32 %v568, 0.01
    %v573 = vsel %vm569, %v567, %v571
    %v574 = vsel %vm570, %v568, %v572
    %v575 = vadd.f32 %v216, %v573
    %v576 = vadd.f32 %v217, %v574
    %s577 = scalar_lea.vmem %s5, 32
    %v578 = vld [vmem:[%s577] sm:$0xff]
    %580 = vset.pattern.permute.xlu0 0
    %581 = vperm.xlu0 %580, %v578
    %v582 = vpop.permute.xlu0 %581
    %v584 = vmul.f32 %v582, %v575
    %v585 = vmul.f32 %v582, %v576
    %s586 = scalar_lea.vmem %s5, 40
    %v587 = vld [vmem:[%s586] sm:$0xff]
    %v590 = vrot.slane %v575, 6
    %v591 = vrot.slane %v576, 6
    %v594 = vsel %vm53, %v590, %v590
    %v595 = vsel %vm53, %v591, %v591
    %597 = vset.pattern.permute.xlu0 0
    %598 = vperm.xlu0 %597, %v587
    %v599 = vpop.permute.xlu0 %598
    %v601 = vmul.f32 %v599, %v594
    %v602 = vmul.f32 %v599, %v595
    %v603 = vadd.f32 %v584, %v601
    %v604 = vadd.f32 %v585, %v602
    %s605 = scalar_lea.vmem %s5, 48
    %v606 = vld [vmem:[%s605] sm:$0xff]
    %v607 = vrot.slane %v575, 4
    %v608 = vrot.slane %v576, 4
    %v611 = vsel %vm71, %v607, %v607
    %v612 = vsel %vm71, %v608, %v608
    %614 = vset.pattern.permute.xlu0 0
    %615 = vperm.xlu0 %614, %v606
    %v616 = vpop.permute.xlu0 %615
    %v618 = vmul.f32 %v616, %v611
    %v619 = vmul.f32 %v616, %v612
    %v620 = vadd.f32 %v603, %v618
    %v621 = vadd.f32 %v604, %v619
    %s622 = scalar_lea.vmem %s5, 56
    %v623 = vld [vmem:[%s622] sm:$0xff]
    %v624 = vrot.slane %v575, 2
    %v625 = vrot.slane %v576, 2
    %v628 = vsel %vm89, %v624, %v624
    %v629 = vsel %vm89, %v625, %v625
    %631 = vset.pattern.permute.xlu0 0
    %632 = vperm.xlu0 %631, %v623
    %v633 = vpop.permute.xlu0 %632
    %v635 = vmul.f32 %v633, %v628
    %v636 = vmul.f32 %v633, %v629
    %v637 = vadd.f32 %v620, %v635
    %v638 = vadd.f32 %v621, %v636
    %v639 = vadd.f32 %v637, %v638
    %640 = vadd.xlane.f32.xlu0 %v639
    %v641 = vpop.xlane.xlu0 %640
    %v642 = vsel %vm53, %v641, 0.0
    %v643 = vrot.slane %v642, 4
    %v644 = vadd.f32 %v642, %v643
    %v645 = vrot.slane %v644, 2
    %v646 = vadd.f32 %v644, %v645
    %v647 = vrot.slane %v646, 1
    %v648 = vadd.f32 %v646, %v647
    %v650 = vrot.slane %v641, 2
    %v652 = vsel %vm53, %v650, 0.0
    %v653 = vrot.slane %v652, 4
    %v654 = vadd.f32 %v652, %v653
    %v655 = vrot.slane %v654, 2
    %v656 = vadd.f32 %v654, %v655
    %v657 = vrot.slane %v656, 1
    %v658 = vadd.f32 %v656, %v657
    %v659 = vrot.slane %v641, 4
    %v661 = vsel %vm53, %v659, 0.0
    %v662 = vrot.slane %v661, 4
    %v663 = vadd.f32 %v661, %v662
    %v664 = vrot.slane %v663, 2
    %v665 = vadd.f32 %v663, %v664
    %v666 = vrot.slane %v665, 1
    %v667 = vadd.f32 %v665, %v666
    %v668 = vrot.slane %v641, 6
    %v670 = vsel %vm53, %v668, 0.0
    %v671 = vrot.slane %v670, 4
    %v672 = vadd.f32 %v670, %v671
    %v673 = vrot.slane %v672, 2
    %v674 = vadd.f32 %v672, %v673
    %v675 = vrot.slane %v674, 1
    %v676 = vadd.f32 %v674, %v675
    %v677 = vsel %vm53, %v648, %v658
    %v678 = vsel %vm71, %v677, %v667
    %v679 = vsel %vm89, %v678, %v676
    %v680 = vmul.f32 %v637, %v637
    %v681 = vmul.f32 %v638, %v638
    %v682 = vadd.f32 %v680, %v681
    %683 = vadd.xlane.f32.xlu0 %v682
    %v684 = vpop.xlane.xlu0 %683
    %v685 = vsel %vm53, %v684, 0.0
    %v686 = vrot.slane %v685, 4
    %v687 = vadd.f32 %v685, %v686
    %v688 = vrot.slane %v687, 2
    %v689 = vadd.f32 %v687, %v688
    %v690 = vrot.slane %v689, 1
    %v691 = vadd.f32 %v689, %v690
    %v693 = vrot.slane %v684, 2
    %v695 = vsel %vm53, %v693, 0.0
    %v696 = vrot.slane %v695, 4
    %v697 = vadd.f32 %v695, %v696
    %v698 = vrot.slane %v697, 2
    %v699 = vadd.f32 %v697, %v698
    %v700 = vrot.slane %v699, 1
    %v701 = vadd.f32 %v699, %v700
    %v702 = vrot.slane %v684, 4
    %v704 = vsel %vm53, %v702, 0.0
    %v705 = vrot.slane %v704, 4
    %v706 = vadd.f32 %v704, %v705
    %v707 = vrot.slane %v706, 2
    %v708 = vadd.f32 %v706, %v707
    %v709 = vrot.slane %v708, 1
    %v710 = vadd.f32 %v708, %v709
    %v711 = vrot.slane %v684, 6
    %v713 = vsel %vm53, %v711, 0.0
    %v714 = vrot.slane %v713, 4
    %v715 = vadd.f32 %v713, %v714
    %v716 = vrot.slane %v715, 2
    %v717 = vadd.f32 %v715, %v716
    %v718 = vrot.slane %v717, 1
    %v719 = vadd.f32 %v717, %v718
    %v720 = vsel %vm53, %v691, %v701
    %v721 = vsel %vm71, %v720, %v710
    %v722 = vsel %vm89, %v721, %v719
    %v723 = vmul.f32 %v679, 0.001953125
    %v724 = vmul.f32 %v722, 0.001953125
    %v725 = vmul.f32 %v723, %v723
    %v726 = vsub.f32 %v724, %v725
    %s727 = scalar_lea.vmem %s6, 8
    %v728 = vld [vmem:[%s727] sm:$0xff]
    %v729 = vadd.f32 %v726, 1e-05
    %v730 = vrsqrt.pop %v729
    %v731 = vmul.f32 %v728, %v730
    %s732 = scalar_lea.vmem %s7, 8
    %v733 = vld [vmem:[%s732] sm:$0xff]
    %v734 = vmul.f32 %v723, %v731
    %v735 = vsub.f32 %v733, %v734
    %737 = vset.pattern.permute.xlu0 0
    %738 = vperm.xlu0 %737, %v731
    %v739 = vpop.permute.xlu0 %738
    %v741 = vmul.f32 %v637, %v739
    %v742 = vmul.f32 %v638, %v739
    %744 = vset.pattern.permute.xlu0 0
    %745 = vperm.xlu0 %744, %v735
    %v746 = vpop.permute.xlu0 %745
    %v748 = vadd.f32 %v741, %v746
    %v749 = vadd.f32 %v742, %v746
    %vm750 = vcmp.ge.f32.partialorder %v748, 0.0
    %vm751 = vcmp.ge.f32.partialorder %v749, 0.0
    %v752 = vmul.f32 %v748, 0.01
    %v753 = vmul.f32 %v749, 0.01
    %v754 = vsel %vm750, %v748, %v752
    %v755 = vsel %vm751, %v749, %v753
    %v756 = vadd.f32 %v394, %v754
    %v757 = vadd.f32 %v395, %v755
    %758 = vst [vmem:[#allocation2] sm:$0xff] %v575
    %759 = vst [vmem:[#allocation2 + $0x8] sm:$0xff] %v576
    %760 = vst [vmem:[#allocation4] sm:$0xff] %v756
    %761 = vst [vmem:[#allocation4 + $0x8] sm:$0xff] %v757
    // Predicated region
    $region34: #{tpu_custom_call.1} parent=1 // pred_check
      _
    $region35: #{tpu_custom_call.1} parent=1 // pred_check_branch
      %763 = sbr.rel (0) target = $region37
    $region36: #{tpu_custom_call.1} parent=1 // pred_region
      %s765 = ssub.s32 256, 256
      %766 = vsyncadd [#allocation3], %s765
      %s768 = sshll.u32 [#allocation2], 4
      %s769 = int_to_ptr.vmem [resolvable:$true] %s768
      %771 = dma.vmem_to_hbm [thread:$0]  %s769, 256, %s8, [#allocation3]
    $region37: #{tpu_custom_call.1} parent=1 // pred_fallthru
      _
    // Predicated region
    $region38: #{tpu_custom_call.1} parent=1 // pred_check
      _
    $region39: #{tpu_custom_call.1} parent=1 // pred_check_branch
      %773 = sbr.rel (0) target = $region41
    $region40: #{tpu_custom_call.1} parent=1 // pred_region
      %s775 = ssub.s32 256, 256
      %776 = vsyncadd [#allocation5], %s775
      %s778 = sshll.u32 [#allocation4], 4
      %s779 = int_to_ptr.vmem [resolvable:$true] %s778
      %781 = dma.vmem_to_hbm [thread:$0]  %s779, 256, %s9, [#allocation5]
    $region41: #{tpu_custom_call.1} parent=1 // pred_fallthru
      _
    // Predicated region
    $region42: #{tpu_custom_call.1} parent=1 // pred_check
      _
    $region43: #{tpu_custom_call.1} parent=1 // pred_check_branch
      %783 = sbr.rel (0) target = $region45
    $region44: #{tpu_custom_call.1} parent=1 // pred_region
      %784 = dma.done [#allocation3], 256
    $region45: #{tpu_custom_call.1} parent=1 // pred_fallthru
      _
    // Predicated region
    $region46: #{tpu_custom_call.1} parent=1 // pred_check
      _
    $region47: #{tpu_custom_call.1} parent=1 // pred_check_branch
      %786 = sbr.rel (0) target = $region49
    $region48: #{tpu_custom_call.1} parent=1 // pred_region
      %787 = dma.done [#allocation5], 256
    $region49: #{tpu_custom_call.1} parent=1 // pred_fallthru
      _
    %788 = vsyncpa [#allocation3], 1
    %789 = vsyncpa [#allocation5], 1

</llo_original>
